<compile_context>
chip_gen: v5e
topology: v5e:2x2
jax: 0.10.0
libtpu: 0.0.40
codegen_flags: <defaults>
</compile_context>

<pallas_src>
import math
import jax
import jax.numpy as jnp
from jax.experimental import pallas as pl
from jax.experimental.pallas import tpu as pltpu

# ---------------- model config (small, consistent with the module) ----------
B, S, D = 2, 8, 32          # batch, seq len, d_model ("size")
NH = 4                      # attention heads
DK = D // NH                # per-head dim
DFF = 64                    # feed-forward hidden dim
L = 2                       # number of encoder layers (N in the PyTorch Encoder)
EPS = 1e-6                  # LayerNorm eps


def _layernorm(x, gamma, beta):
    # x: (R, D); gamma/beta: (1, D). torch-style: unbiased std (ddof=1), /(std+eps).
    mean = jnp.mean(x, axis=-1, keepdims=True)
    var = jnp.sum((x - mean) ** 2, axis=-1, keepdims=True) / (x.shape[-1] - 1)
    return gamma * (x - mean) / (jnp.sqrt(var) + EPS) + beta


# ---------------- single fused kernel: N layers + final LayerNorm -----------
def encoder_kernel(x_ref, mask_ref,
                   ln0g_ref, ln0b_ref, qkvw_ref, qkvb_ref, wo_ref, bo_ref,
                   ln1g_ref, ln1b_ref, w1_ref, b1_ref, w2_ref, b2_ref,
                   lnfg_ref, lnfb_ref, o_ref):
    x = x_ref[...].reshape(B * S, D)                     # (B*S, D) position-wise slab
    # additive key-mask bias, computed once for all layers/heads: (B, 1, S)
    bias = jnp.where(mask_ref[...] < 0.5, -1e9, 0.0).astype(jnp.float32)

    for l in range(L):                                   # static unroll over layers
        # ---- sublayer 0: multi-head self-attention --------------------------
        xn = _layernorm(x, ln0g_ref[l], ln0b_ref[l])     # (B*S, D)
        qkv = jnp.dot(xn, qkvw_ref[l],
                      preferred_element_type=jnp.float32) + qkvb_ref[l]   # (B*S, 3D)
        q = qkv[:, 0 * D:1 * D].reshape(B, S, D)         # 1/sqrt(dk) folded into Wq/bq
        k = qkv[:, 1 * D:2 * D].reshape(B, S, D)
        v = qkv[:, 2 * D:3 * D].reshape(B, S, D)

        heads = []
        for h in range(NH):                              # static unroll over heads
            sl = slice(h * DK, (h + 1) * DK)
            s = jnp.einsum("bqd,bkd->bqk", q[..., sl], k[..., sl],
                           preferred_element_type=jnp.float32) + bias     # (B, S, S)
            s = s - jnp.max(s, axis=-1, keepdims=True)
            e = jnp.exp(s)
            p = e / jnp.sum(e, axis=-1, keepdims=True)
            heads.append(jnp.einsum("bqk,bkd->bqd", p, v[..., sl],
                                    preferred_element_type=jnp.float32))
        concat = jnp.concatenate(heads, axis=-1).reshape(B * S, D)
        attn = jnp.dot(concat, wo_ref[l],
                       preferred_element_type=jnp.float32) + bo_ref[l]
        x = x + attn                                     # residual

        # ---- sublayer 1: position-wise feed-forward -------------------------
        xn = _layernorm(x, ln1g_ref[l], ln1b_ref[l])
        h1 = jnp.dot(xn, w1_ref[l], preferred_element_type=jnp.float32) + b1_ref[l]
        h1 = jnp.maximum(h1, 0.0)                        # ReLU
        y = jnp.dot(h1, w2_ref[l], preferred_element_type=jnp.float32) + b2_ref[l]
        x = x + y                                        # residual

    # ---- final LayerNorm of the Encoder -------------------------------------
    o_ref[...] = _layernorm(x, lnfg_ref[...], lnfb_ref[...]).reshape(B, S, D)


# ---------------- wrapper -----------------------------------------------------
def encoder_forward(x, mask, kp):
    args = (x, mask,
            kp["ln0_g"], kp["ln0_b"], kp["qkv_w"], kp["qkv_b"], kp["wo"], kp["bo"],
            kp["ln1_g"], kp["ln1_b"], kp["w1"], kp["b1"], kp["w2"], kp["b2"],
            kp["lnf_g"], kp["lnf_b"])
    vmem = pl.BlockSpec(memory_space=pltpu.MemorySpace.VMEM)   # full arrays in VMEM,
    return pl.pallas_call(                                      # single grid step
        encoder_kernel,
        out_shape=jax.ShapeDtypeStruct((B, S, D), jnp.float32),
        in_specs=[vmem] * len(args),
        out_specs=vmem,
    )(*args)


# ---------------- parameter construction -------------------------------------
def make_base_params(key):
    keys = iter(jax.random.split(key, 64))

    def nrm(shape, scale=0.1):
        return (scale * jax.random.normal(next(keys), shape)).astype(jnp.float32)

    layers = []
    for _ in range(L):
        layers.append(dict(
            ln0_g=1.0 + nrm((1, D), 0.05), ln0_b=nrm((1, D), 0.05),
            # linear weights stored (in, out): x @ W + b  (== nn.Linear x @ W.T + b)
            wq=nrm((D, D)), bq=nrm((1, D)),
            wk=nrm((D, D)), bk=nrm((1, D)),
            wv=nrm((D, D)), bv=nrm((1, D)),
            wo=nrm((D, D)), bo=nrm((1, D)),
            ln1_g=1.0 + nrm((1, D), 0.05), ln1_b=nrm((1, D), 0.05),
            w1=nrm((D, DFF)), b1=nrm((1, DFF)),
            w2=nrm((DFF, D)), b2=nrm((1, D)),
        ))
    lnf_g = 1.0 + nrm((1, D), 0.05)
    lnf_b = nrm((1, D), 0.05)
    return layers, lnf_g, lnf_b


def make_kernel_params(layers, lnf_g, lnf_b):
    # Fuse QKV (scale folded into the Q part) and stack per-layer params along L.
    scale = 1.0 / math.sqrt(DK)
    st = lambda name: jnp.stack([p[name] for p in layers])
    qkv_w = jnp.stack([jnp.concatenate([p["wq"] * scale, p["wk"], p["wv"]], axis=1)
                       for p in layers])                        # (L, D, 3D)
    qkv_b = jnp.stack([jnp.concatenate([p["bq"] * scale, p["bk"], p["bv"]], axis=1)
                       for p in layers])                        # (L, 1, 3D)
    return dict(qkv_w=qkv_w, qkv_b=qkv_b,
                wo=st("wo"), bo=st("bo"),
                ln0_g=st("ln0_g"), ln0_b=st("ln0_b"),
                ln1_g=st("ln1_g"), ln1_b=st("ln1_b"),
                w1=st("w1"), b1=st("b1"), w2=st("w2"), b2=st("b2"),
                lnf_g=lnf_g, lnf_b=lnf_b)


# ---------------- plain-JAX reference (for the sanity check) ------------------
def encoder_ref(x, mask, layers, lnf_g, lnf_b):
    def ln(t, g, b):
        mean = jnp.mean(t, axis=-1, keepdims=True)
        var = jnp.sum((t - mean) ** 2, axis=-1, keepdims=True) / (t.shape[-1] - 1)
        return g * (t - mean) / (jnp.sqrt(var) + EPS) + b

    for p in layers:
        xn = ln(x, p["ln0_g"], p["ln0_b"])
        q = xn @ p["wq"] + p["bq"]
        k = xn @ p["wk"] + p["bk"]
        v = xn @ p["wv"] + p["bv"]
        qh = q.reshape(B, S, NH, DK).transpose(0, 2, 1, 3)
        kh = k.reshape(B, S, NH, DK).transpose(0, 2, 1, 3)
        vh = v.reshape(B, S, NH, DK).transpose(0, 2, 1, 3)
        s = jnp.einsum("bhqd,bhkd->bhqk", qh, kh) / math.sqrt(DK)
        s = jnp.where(mask[:, None, :, :] == 0.0, -1e9, s)
        a = jax.nn.softmax(s, axis=-1)
        o = jnp.einsum("bhqk,bhkd->bhqd", a, vh).transpose(0, 2, 1, 3).reshape(B, S, D)
        x = x + (o @ p["wo"] + p["bo"])
        xn = ln(x, p["ln1_g"], p["ln1_b"])
        hfc = jnp.maximum(xn @ p["w1"] + p["b1"], 0.0)
        x = x + (hfc @ p["w2"] + p["b2"])
    return ln(x, lnf_g, lnf_b)


# ---------------- main ---------------------------------------------------------
if __name__ == "__main__":
    layers, lnf_g, lnf_b = make_base_params(jax.random.PRNGKey(0))
    kparams = make_kernel_params(layers, lnf_g, lnf_b)

    kx, _ = jax.random.split(jax.random.PRNGKey(1))
    x = jax.random.normal(kx, (B, S, D), jnp.float32)
    # mask: keep first few positions per batch (1 = attend, 0 = masked)
    lengths = jnp.array([S, S - 3])
    mask = (jnp.arange(S)[None, None, :] < lengths[:, None, None]).astype(jnp.float32)

    out = jax.block_until_ready(encoder_forward(x, mask, kparams))
    ref = encoder_ref(x, mask, layers, lnf_g, lnf_b)

    assert out.shape == (B, S, D)
    assert jnp.allclose(out, ref, rtol=1e-3, atol=1e-3), "mismatch vs reference"

    # TODO(synk): nn.Dropout is identity in eval mode (p effectively 0); not modeled.
    print("KERNEL_OK")
</pallas_src>

<mosaic_0001>
module attributes {stable_mosaic.version = 11 : i64} {
  func.func @encoder_kernel(%arg0: memref<2x8x32xf32, #tpu.memory_space<vmem>>, %arg1: memref<2x1x8xf32, #tpu.memory_space<vmem>>, %arg2: memref<2x1x32xf32, #tpu.memory_space<vmem>>, %arg3: memref<2x1x32xf32, #tpu.memory_space<vmem>>, %arg4: memref<2x32x96xf32, #tpu.memory_space<vmem>>, %arg5: memref<2x1x96xf32, #tpu.memory_space<vmem>>, %arg6: memref<2x32x32xf32, #tpu.memory_space<vmem>>, %arg7: memref<2x1x32xf32, #tpu.memory_space<vmem>>, %arg8: memref<2x1x32xf32, #tpu.memory_space<vmem>>, %arg9: memref<2x1x32xf32, #tpu.memory_space<vmem>>, %arg10: memref<2x32x64xf32, #tpu.memory_space<vmem>>, %arg11: memref<2x1x64xf32, #tpu.memory_space<vmem>>, %arg12: memref<2x64x32xf32, #tpu.memory_space<vmem>>, %arg13: memref<2x1x32xf32, #tpu.memory_space<vmem>>, %arg14: memref<1x32xf32, #tpu.memory_space<vmem>>, %arg15: memref<1x32xf32, #tpu.memory_space<vmem>>, %arg16: memref<2x8x32xf32, #tpu.memory_space<vmem>>) attributes {dimension_semantics = [], scalar_prefetch = 0 : i64, scratch_operands = 0 : i64, tpu.core_type = #tpu.core_type<tc>} {
    %c0 = arith.constant 0 : index
    %c0_0 = arith.constant 0 : index
    %c0_1 = arith.constant 0 : index
    %0 = vector.load %arg0[%c0, %c0_0, %c0_1] : memref<2x8x32xf32, #tpu.memory_space<vmem>>, vector<2x8x32xf32>
    %1 = vector.shape_cast %0 : vector<2x8x32xf32> to vector<16x32xf32>
    %c0_2 = arith.constant 0 : index
    %c0_3 = arith.constant 0 : index
    %c0_4 = arith.constant 0 : index
    %2 = vector.load %arg1[%c0_2, %c0_3, %c0_4] : memref<2x1x8xf32, #tpu.memory_space<vmem>>, vector<2x1x8xf32>
    %cst = arith.constant 5.000000e-01 : f32
    %3 = vector.broadcast %cst : f32 to vector<2x1x8xf32>
    %4 = arith.cmpf olt, %2, %3 : vector<2x1x8xf32>
    %cst_5 = arith.constant -1.000000e+09 : f32
    %cst_6 = arith.constant 0.000000e+00 : f32
    %5 = vector.broadcast %cst_5 : f32 to vector<2x1x8xf32>
    %6 = vector.broadcast %cst_6 : f32 to vector<2x1x8xf32>
    %7 = arith.select %4, %5, %6 : vector<2x1x8xi1>, vector<2x1x8xf32>
    %c0_7 = arith.constant 0 : index
    %c0_8 = arith.constant 0 : index
    %c0_9 = arith.constant 0 : index
    %8 = vector.load %arg2[%c0_7, %c0_8, %c0_9] : memref<2x1x32xf32, #tpu.memory_space<vmem>>, vector<1x1x32xf32>
    %9 = vector.shape_cast %8 : vector<1x1x32xf32> to vector<1x32xf32>
    %c0_10 = arith.constant 0 : index
    %c0_11 = arith.constant 0 : index
    %c0_12 = arith.constant 0 : index
    %10 = vector.load %arg3[%c0_10, %c0_11, %c0_12] : memref<2x1x32xf32, #tpu.memory_space<vmem>>, vector<1x1x32xf32>
    %11 = vector.shape_cast %10 : vector<1x1x32xf32> to vector<1x32xf32>
    %cst_13 = arith.constant dense<0.000000e+00> : vector<16xf32>
    %12 = vector.multi_reduction <add>, %1, %cst_13 [1] : vector<16x32xf32> to vector<16xf32>
    %13 = vector.shape_cast %12 : vector<16xf32> to vector<16x1xf32>
    %cst_14 = arith.constant 3.200000e+01 : f32
    %14 = vector.broadcast %cst_14 : f32 to vector<16x1xf32>
    %15 = arith.divf %13, %14 : vector<16x1xf32>
    %16 = vector.broadcast %15 : vector<16x1xf32> to vector<16x32xf32>
    %17 = arith.subf %1, %16 : vector<16x32xf32>
    %18 = arith.mulf %17, %17 : vector<16x32xf32>
    %cst_15 = arith.constant dense<0.000000e+00> : vector<16xf32>
    %19 = vector.multi_reduction <add>, %18, %cst_15 [1] : vector<16x32xf32> to vector<16xf32>
    %20 = vector.shape_cast %19 : vector<16xf32> to vector<16x1xf32>
    %cst_16 = arith.constant 3.100000e+01 : f32
    %21 = vector.broadcast %cst_16 : f32 to vector<16x1xf32>
    %22 = arith.divf %20, %21 : vector<16x1xf32>
    %23 = vector.broadcast %15 : vector<16x1xf32> to vector<16x32xf32>
    %24 = arith.subf %1, %23 : vector<16x32xf32>
    %25 = vector.broadcast %9 : vector<1x32xf32> to vector<16x32xf32>
    %26 = arith.mulf %25, %24 : vector<16x32xf32>
    %27 = math.sqrt %22 : vector<16x1xf32>
    %cst_17 = arith.constant 9.99999997E-7 : f32
    %28 = vector.broadcast %cst_17 : f32 to vector<16x1xf32>
    %29 = arith.addf %27, %28 : vector<16x1xf32>
    %30 = vector.broadcast %29 : vector<16x1xf32> to vector<16x32xf32>
    %31 = arith.divf %26, %30 : vector<16x32xf32>
    %32 = vector.broadcast %11 : vector<1x32xf32> to vector<16x32xf32>
    %33 = arith.addf %31, %32 : vector<16x32xf32>
    %c0_18 = arith.constant 0 : index
    %c0_19 = arith.constant 0 : index
    %c0_20 = arith.constant 0 : index
    %34 = vector.load %arg4[%c0_18, %c0_19, %c0_20] : memref<2x32x96xf32, #tpu.memory_space<vmem>>, vector<1x32x96xf32>
    %35 = vector.shape_cast %34 : vector<1x32x96xf32> to vector<32x96xf32>
    %cst_21 = arith.constant dense<0.000000e+00> : vector<16x96xf32>
    %36 = tpu.matmul %33, %35, %cst_21 {dimension_numbers = #tpu.dot_dimension_numbers<[1], [0], [0], [1], [0, 0, 1, 1], [], []>} : vector<16x32xf32>, vector<32x96xf32>, vector<16x96xf32> -> vector<16x96xf32>
    %c0_22 = arith.constant 0 : index
    %c0_23 = arith.constant 0 : index
    %c0_24 = arith.constant 0 : index
    %37 = vector.load %arg5[%c0_22, %c0_23, %c0_24] : memref<2x1x96xf32, #tpu.memory_space<vmem>>, vector<1x1x96xf32>
    %38 = vector.shape_cast %37 : vector<1x1x96xf32> to vector<1x96xf32>
    %39 = vector.broadcast %38 : vector<1x96xf32> to vector<16x96xf32>
    %40 = arith.addf %36, %39 : vector<16x96xf32>
    %41 = vector.extract_strided_slice %40 {offsets = [0, 0], sizes = [16, 32], strides = [1, 1]} : vector<16x96xf32> to vector<16x32xf32>
    %42 = vector.shape_cast %41 : vector<16x32xf32> to vector<2x8x32xf32>
    %43 = vector.extract_strided_slice %40 {offsets = [0, 32], sizes = [16, 32], strides = [1, 1]} : vector<16x96xf32> to vector<16x32xf32>
    %44 = vector.shape_cast %43 : vector<16x32xf32> to vector<2x8x32xf32>
    %45 = vector.extract_strided_slice %40 {offsets = [0, 64], sizes = [16, 32], strides = [1, 1]} : vector<16x96xf32> to vector<16x32xf32>
    %46 = vector.shape_cast %45 : vector<16x32xf32> to vector<2x8x32xf32>
    %47 = vector.extract_strided_slice %42 {offsets = [0, 0, 0], sizes = [2, 8, 8], strides = [1, 1, 1]} : vector<2x8x32xf32> to vector<2x8x8xf32>
    %48 = vector.extract_strided_slice %44 {offsets = [0, 0, 0], sizes = [2, 8, 8], strides = [1, 1, 1]} : vector<2x8x32xf32> to vector<2x8x8xf32>
    "tpu.trace_start"() <{level = 10 : i32, message = "bqd,bkd->bqk"}> : () -> ()
    %cst_25 = arith.constant dense<0.000000e+00> : vector<2x8x8xf32>
    %49 = tpu.matmul %47, %48, %cst_25 {dimension_numbers = #tpu.dot_dimension_numbers<[2], [2], [1], [1], [0, 0, 0, 1, 1, 1], [0], [0]>} : vector<2x8x8xf32>, vector<2x8x8xf32>, vector<2x8x8xf32> -> vector<2x8x8xf32>
    "tpu.trace_stop"() : () -> ()
    %50 = vector.broadcast %7 : vector<2x1x8xf32> to vector<2x8x8xf32>
    %51 = arith.addf %49, %50 : vector<2x8x8xf32>
    %cst_26 = arith.constant dense<0xFF800000> : vector<2x8xf32>
    %52 = vector.multi_reduction <maximumf>, %51, %cst_26 [2] : vector<2x8x8xf32> to vector<2x8xf32>
    %53 = vector.shape_cast %52 : vector<2x8xf32> to vector<2x8x1xf32>
    %54 = vector.broadcast %53 : vector<2x8x1xf32> to vector<2x8x8xf32>
    %55 = arith.subf %51, %54 : vector<2x8x8xf32>
    %56 = math.exp %55 : vector<2x8x8xf32>
    %cst_27 = arith.constant dense<0.000000e+00> : vector<2x8xf32>
    %57 = vector.multi_reduction <add>, %56, %cst_27 [2] : vector<2x8x8xf32> to vector<2x8xf32>
    %58 = vector.shape_cast %57 : vector<2x8xf32> to vector<2x8x1xf32>
    %59 = vector.broadcast %58 : vector<2x8x1xf32> to vector<2x8x8xf32>
    %60 = arith.divf %56, %59 : vector<2x8x8xf32>
    %61 = vector.extract_strided_slice %46 {offsets = [0, 0, 0], sizes = [2, 8, 8], strides = [1, 1, 1]} : vector<2x8x32xf32> to vector<2x8x8xf32>
    "tpu.trace_start"() <{level = 10 : i32, message = "bqk,bkd->bqd"}> : () -> ()
    %cst_28 = arith.constant dense<0.000000e+00> : vector<2x8x8xf32>
    %62 = tpu.matmul %60, %61, %cst_28 {dimension_numbers = #tpu.dot_dimension_numbers<[2], [1], [1], [2], [0, 0, 0, 1, 1, 2], [0], [0]>} : vector<2x8x8xf32>, vector<2x8x8xf32>, vector<2x8x8xf32> -> vector<2x8x8xf32>
    "tpu.trace_stop"() : () -> ()
    %63 = vector.extract_strided_slice %42 {offsets = [0, 0, 8], sizes = [2, 8, 8], strides = [1, 1, 1]} : vector<2x8x32xf32> to vector<2x8x8xf32>
    %64 = vector.extract_strided_slice %44 {offsets = [0, 0, 8], sizes = [2, 8, 8], strides = [1, 1, 1]} : vector<2x8x32xf32> to vector<2x8x8xf32>
    "tpu.trace_start"() <{level = 10 : i32, message = "bqd,bkd->bqk"}> : () -> ()
    %cst_29 = arith.constant dense<0.000000e+00> : vector<2x8x8xf32>
    %65 = tpu.matmul %63, %64, %cst_29 {dimension_numbers = #tpu.dot_dimension_numbers<[2], [2], [1], [1], [0, 0, 0, 1, 1, 1], [0], [0]>} : vector<2x8x8xf32>, vector<2x8x8xf32>, vector<2x8x8xf32> -> vector<2x8x8xf32>
    "tpu.trace_stop"() : () -> ()
    %66 = vector.broadcast %7 : vector<2x1x8xf32> to vector<2x8x8xf32>
    %67 = arith.addf %65, %66 : vector<2x8x8xf32>
    %cst_30 = arith.constant dense<0xFF800000> : vector<2x8xf32>
    %68 = vector.multi_reduction <maximumf>, %67, %cst_30 [2] : vector<2x8x8xf32> to vector<2x8xf32>
    %69 = vector.shape_cast %68 : vector<2x8xf32> to vector<2x8x1xf32>
    %70 = vector.broadcast %69 : vector<2x8x1xf32> to vector<2x8x8xf32>
    %71 = arith.subf %67, %70 : vector<2x8x8xf32>
    %72 = math.exp %71 : vector<2x8x8xf32>
    %cst_31 = arith.constant dense<0.000000e+00> : vector<2x8xf32>
    %73 = vector.multi_reduction <add>, %72, %cst_31 [2] : vector<2x8x8xf32> to vector<2x8xf32>
    %74 = vector.shape_cast %73 : vector<2x8xf32> to vector<2x8x1xf32>
    %75 = vector.broadcast %74 : vector<2x8x1xf32> to vector<2x8x8xf32>
    %76 = arith.divf %72, %75 : vector<2x8x8xf32>
    %77 = vector.extract_strided_slice %46 {offsets = [0, 0, 8], sizes = [2, 8, 8], strides = [1, 1, 1]} : vector<2x8x32xf32> to vector<2x8x8xf32>
    "tpu.trace_start"() <{level = 10 : i32, message = "bqk,bkd->bqd"}> : () -> ()
    %cst_32 = arith.constant dense<0.000000e+00> : vector<2x8x8xf32>
    %78 = tpu.matmul %76, %77, %cst_32 {dimension_numbers = #tpu.dot_dimension_numbers<[2], [1], [1], [2], [0, 0, 0, 1, 1, 2], [0], [0]>} : vector<2x8x8xf32>, vector<2x8x8xf32>, vector<2x8x8xf32> -> vector<2x8x8xf32>
    "tpu.trace_stop"() : () -> ()
    %79 = vector.extract_strided_slice %42 {offsets = [0, 0, 16], sizes = [2, 8, 8], strides = [1, 1, 1]} : vector<2x8x32xf32> to vector<2x8x8xf32>
    %80 = vector.extract_strided_slice %44 {offsets = [0, 0, 16], sizes = [2, 8, 8], strides = [1, 1, 1]} : vector<2x8x32xf32> to vector<2x8x8xf32>
    "tpu.trace_start"() <{level = 10 : i32, message = "bqd,bkd->bqk"}> : () -> ()
    %cst_33 = arith.constant dense<0.000000e+00> : vector<2x8x8xf32>
    %81 = tpu.matmul %79, %80, %cst_33 {dimension_numbers = #tpu.dot_dimension_numbers<[2], [2], [1], [1], [0, 0, 0, 1, 1, 1], [0], [0]>} : vector<2x8x8xf32>, vector<2x8x8xf32>, vector<2x8x8xf32> -> vector<2x8x8xf32>
    "tpu.trace_stop"() : () -> ()
    %82 = vector.broadcast %7 : vector<2x1x8xf32> to vector<2x8x8xf32>
    %83 = arith.addf %81, %82 : vector<2x8x8xf32>
    %cst_34 = arith.constant dense<0xFF800000> : vector<2x8xf32>
    %84 = vector.multi_reduction <maximumf>, %83, %cst_34 [2] : vector<2x8x8xf32> to vector<2x8xf32>
    %85 = vector.shape_cast %84 : vector<2x8xf32> to vector<2x8x1xf32>
    %86 = vector.broadcast %85 : vector<2x8x1xf32> to vector<2x8x8xf32>
    %87 = arith.subf %83, %86 : vector<2x8x8xf32>
    %88 = math.exp %87 : vector<2x8x8xf32>
    %cst_35 = arith.constant dense<0.000000e+00> : vector<2x8xf32>
    %89 = vector.multi_reduction <add>, %88, %cst_35 [2] : vector<2x8x8xf32> to vector<2x8xf32>
    %90 = vector.shape_cast %89 : vector<2x8xf32> to vector<2x8x1xf32>
    %91 = vector.broadcast %90 : vector<2x8x1xf32> to vector<2x8x8xf32>
    %92 = arith.divf %88, %91 : vector<2x8x8xf32>
    %93 = vector.extract_strided_slice %46 {offsets = [0, 0, 16], sizes = [2, 8, 8], strides = [1, 1, 1]} : vector<2x8x32xf32> to vector<2x8x8xf32>
    "tpu.trace_start"() <{level = 10 : i32, message = "bqk,bkd->bqd"}> : () -> ()
    %cst_36 = arith.constant dense<0.000000e+00> : vector<2x8x8xf32>
    %94 = tpu.matmul %92, %93, %cst_36 {dimension_numbers = #tpu.dot_dimension_numbers<[2], [1], [1], [2], [0, 0, 0, 1, 1, 2], [0], [0]>} : vector<2x8x8xf32>, vector<2x8x8xf32>, vector<2x8x8xf32> -> vector<2x8x8xf32>
    "tpu.trace_stop"() : () -> ()
    %95 = vector.extract_strided_slice %42 {offsets = [0, 0, 24], sizes = [2, 8, 8], strides = [1, 1, 1]} : vector<2x8x32xf32> to vector<2x8x8xf32>
    %96 = vector.extract_strided_slice %44 {offsets = [0, 0, 24], sizes = [2, 8, 8], strides = [1, 1, 1]} : vector<2x8x32xf32> to vector<2x8x8xf32>
    "tpu.trace_start"() <{level = 10 : i32, message = "bqd,bkd->bqk"}> : () -> ()
    %cst_37 = arith.constant dense<0.000000e+00> : vector<2x8x8xf32>
    %97 = tpu.matmul %95, %96, %cst_37 {dimension_numbers = #tpu.dot_dimension_numbers<[2], [2], [1], [1], [0, 0, 0, 1, 1, 1], [0], [0]>} : vector<2x8x8xf32>, vector<2x8x8xf32>, vector<2x8x8xf32> -> vector<2x8x8xf32>
    "tpu.trace_stop"() : () -> ()
    %98 = vector.broadcast %7 : vector<2x1x8xf32> to vector<2x8x8xf32>
    %99 = arith.addf %97, %98 : vector<2x8x8xf32>
    %cst_38 = arith.constant dense<0xFF800000> : vector<2x8xf32>
    %100 = vector.multi_reduction <maximumf>, %99, %cst_38 [2] : vector<2x8x8xf32> to vector<2x8xf32>
    %101 = vector.shape_cast %100 : vector<2x8xf32> to vector<2x8x1xf32>
    %102 = vector.broadcast %101 : vector<2x8x1xf32> to vector<2x8x8xf32>
    %103 = arith.subf %99, %102 : vector<2x8x8xf32>
    %104 = math.exp %103 : vector<2x8x8xf32>
    %cst_39 = arith.constant dense<0.000000e+00> : vector<2x8xf32>
    %105 = vector.multi_reduction <add>, %104, %cst_39 [2] : vector<2x8x8xf32> to vector<2x8xf32>
    %106 = vector.shape_cast %105 : vector<2x8xf32> to vector<2x8x1xf32>
    %107 = vector.broadcast %106 : vector<2x8x1xf32> to vector<2x8x8xf32>
    %108 = arith.divf %104, %107 : vector<2x8x8xf32>
    %109 = vector.extract_strided_slice %46 {offsets = [0, 0, 24], sizes = [2, 8, 8], strides = [1, 1, 1]} : vector<2x8x32xf32> to vector<2x8x8xf32>
    "tpu.trace_start"() <{level = 10 : i32, message = "bqk,bkd->bqd"}> : () -> ()
    %cst_40 = arith.constant dense<0.000000e+00> : vector<2x8x8xf32>
    %110 = tpu.matmul %108, %109, %cst_40 {dimension_numbers = #tpu.dot_dimension_numbers<[2], [1], [1], [2], [0, 0, 0, 1, 1, 2], [0], [0]>} : vector<2x8x8xf32>, vector<2x8x8xf32>, vector<2x8x8xf32> -> vector<2x8x8xf32>
    "tpu.trace_stop"() : () -> ()
    %111 = tpu.concatenate %62, %78, %94, %110 in 2 : vector<2x8x8xf32>, vector<2x8x8xf32>, vector<2x8x8xf32>, vector<2x8x8xf32> -> vector<2x8x32xf32>
    %112 = vector.shape_cast %111 : vector<2x8x32xf32> to vector<16x32xf32>
    %c0_41 = arith.constant 0 : index
    %c0_42 = arith.constant 0 : index
    %c0_43 = arith.constant 0 : index
    %113 = vector.load %arg6[%c0_41, %c0_42, %c0_43] : memref<2x32x32xf32, #tpu.memory_space<vmem>>, vector<1x32x32xf32>
    %114 = vector.shape_cast %113 : vector<1x32x32xf32> to vector<32x32xf32>
    %cst_44 = arith.constant dense<0.000000e+00> : vector<16x32xf32>
    %115 = tpu.matmul %112, %114, %cst_44 {dimension_numbers = #tpu.dot_dimension_numbers<[1], [0], [0], [1], [0, 0, 1, 1], [], []>} : vector<16x32xf32>, vector<32x32xf32>, vector<16x32xf32> -> vector<16x32xf32>
    %c0_45 = arith.constant 0 : index
    %c0_46 = arith.constant 0 : index
    %c0_47 = arith.constant 0 : index
    %116 = vector.load %arg7[%c0_45, %c0_46, %c0_47] : memref<2x1x32xf32, #tpu.memory_space<vmem>>, vector<1x1x32xf32>
    %117 = vector.shape_cast %116 : vector<1x1x32xf32> to vector<1x32xf32>
    %118 = vector.broadcast %117 : vector<1x32xf32> to vector<16x32xf32>
    %119 = arith.addf %115, %118 : vector<16x32xf32>
    %120 = arith.addf %1, %119 : vector<16x32xf32>
    %c0_48 = arith.constant 0 : index
    %c0_49 = arith.constant 0 : index
    %c0_50 = arith.constant 0 : index
    %121 = vector.load %arg8[%c0_48, %c0_49, %c0_50] : memref<2x1x32xf32, #tpu.memory_space<vmem>>, vector<1x1x32xf32>
    %122 = vector.shape_cast %121 : vector<1x1x32xf32> to vector<1x32xf32>
    %c0_51 = arith.constant 0 : index
    %c0_52 = arith.constant 0 : index
    %c0_53 = arith.constant 0 : index
    %123 = vector.load %arg9[%c0_51, %c0_52, %c0_53] : memref<2x1x32xf32, #tpu.memory_space<vmem>>, vector<1x1x32xf32>
    %124 = vector.shape_cast %123 : vector<1x1x32xf32> to vector<1x32xf32>
    %cst_54 = arith.constant dense<0.000000e+00> : vector<16xf32>
    %125 = vector.multi_reduction <add>, %120, %cst_54 [1] : vector<16x32xf32> to vector<16xf32>
    %126 = vector.shape_cast %125 : vector<16xf32> to vector<16x1xf32>
    %cst_55 = arith.constant 3.200000e+01 : f32
    %127 = vector.broadcast %cst_55 : f32 to vector<16x1xf32>
    %128 = arith.divf %126, %127 : vector<16x1xf32>
    %129 = vector.broadcast %128 : vector<16x1xf32> to vector<16x32xf32>
    %130 = arith.subf %120, %129 : vector<16x32xf32>
    %131 = arith.mulf %130, %130 : vector<16x32xf32>
    %cst_56 = arith.constant dense<0.000000e+00> : vector<16xf32>
    %132 = vector.multi_reduction <add>, %131, %cst_56 [1] : vector<16x32xf32> to vector<16xf32>
    %133 = vector.shape_cast %132 : vector<16xf32> to vector<16x1xf32>
    %cst_57 = arith.constant 3.100000e+01 : f32
    %134 = vector.broadcast %cst_57 : f32 to vector<16x1xf32>
    %135 = arith.divf %133, %134 : vector<16x1xf32>
    %136 = vector.broadcast %128 : vector<16x1xf32> to vector<16x32xf32>
    %137 = arith.subf %120, %136 : vector<16x32xf32>
    %138 = vector.broadcast %122 : vector<1x32xf32> to vector<16x32xf32>
    %139 = arith.mulf %138, %137 : vector<16x32xf32>
    %140 = math.sqrt %135 : vector<16x1xf32>
    %cst_58 = arith.constant 9.99999997E-7 : f32
    %141 = vector.broadcast %cst_58 : f32 to vector<16x1xf32>
    %142 = arith.addf %140, %141 : vector<16x1xf32>
    %143 = vector.broadcast %142 : vector<16x1xf32> to vector<16x32xf32>
    %144 = arith.divf %139, %143 : vector<16x32xf32>
    %145 = vector.broadcast %124 : vector<1x32xf32> to vector<16x32xf32>
    %146 = arith.addf %144, %145 : vector<16x32xf32>
    %c0_59 = arith.constant 0 : index
    %c0_60 = arith.constant 0 : index
    %c0_61 = arith.constant 0 : index
    %147 = vector.load %arg10[%c0_59, %c0_60, %c0_61] : memref<2x32x64xf32, #tpu.memory_space<vmem>>, vector<1x32x64xf32>
    %148 = vector.shape_cast %147 : vector<1x32x64xf32> to vector<32x64xf32>
    %cst_62 = arith.constant dense<0.000000e+00> : vector<16x64xf32>
    %149 = tpu.matmul %146, %148, %cst_62 {dimension_numbers = #tpu.dot_dimension_numbers<[1], [0], [0], [1], [0, 0, 1, 1], [], []>} : vector<16x32xf32>, vector<32x64xf32>, vector<16x64xf32> -> vector<16x64xf32>
    %c0_63 = arith.constant 0 : index
    %c0_64 = arith.constant 0 : index
    %c0_65 = arith.constant 0 : index
    %150 = vector.load %arg11[%c0_63, %c0_64, %c0_65] : memref<2x1x64xf32, #tpu.memory_space<vmem>>, vector<1x1x64xf32>
    %151 = vector.shape_cast %150 : vector<1x1x64xf32> to vector<1x64xf32>
    %152 = vector.broadcast %151 : vector<1x64xf32> to vector<16x64xf32>
    %153 = arith.addf %149, %152 : vector<16x64xf32>
    %cst_66 = arith.constant 0.000000e+00 : f32
    %154 = vector.broadcast %cst_66 : f32 to vector<16x64xf32>
    %155 = arith.maximumf %153, %154 : vector<16x64xf32>
    %c0_67 = arith.constant 0 : index
    %c0_68 = arith.constant 0 : index
    %c0_69 = arith.constant 0 : index
    %156 = vector.load %arg12[%c0_67, %c0_68, %c0_69] : memref<2x64x32xf32, #tpu.memory_space<vmem>>, vector<1x64x32xf32>
    %157 = vector.shape_cast %156 : vector<1x64x32xf32> to vector<64x32xf32>
    %cst_70 = arith.constant dense<0.000000e+00> : vector<16x32xf32>
    %158 = tpu.matmul %155, %157, %cst_70 {dimension_numbers = #tpu.dot_dimension_numbers<[1], [0], [0], [1], [0, 0, 1, 1], [], []>} : vector<16x64xf32>, vector<64x32xf32>, vector<16x32xf32> -> vector<16x32xf32>
    %c0_71 = arith.constant 0 : index
    %c0_72 = arith.constant 0 : index
    %c0_73 = arith.constant 0 : index
    %159 = vector.load %arg13[%c0_71, %c0_72, %c0_73] : memref<2x1x32xf32, #tpu.memory_space<vmem>>, vector<1x1x32xf32>
    %160 = vector.shape_cast %159 : vector<1x1x32xf32> to vector<1x32xf32>
    %161 = vector.broadcast %160 : vector<1x32xf32> to vector<16x32xf32>
    %162 = arith.addf %158, %161 : vector<16x32xf32>
    %163 = arith.addf %120, %162 : vector<16x32xf32>
    %c1 = arith.constant 1 : index
    %c0_74 = arith.constant 0 : index
    %c0_75 = arith.constant 0 : index
    %164 = vector.load %arg2[%c1, %c0_74, %c0_75] : memref<2x1x32xf32, #tpu.memory_space<vmem>>, vector<1x1x32xf32>
    %165 = vector.shape_cast %164 : vector<1x1x32xf32> to vector<1x32xf32>
    %c1_76 = arith.constant 1 : index
    %c0_77 = arith.constant 0 : index
    %c0_78 = arith.constant 0 : index
    %166 = vector.load %arg3[%c1_76, %c0_77, %c0_78] : memref<2x1x32xf32, #tpu.memory_space<vmem>>, vector<1x1x32xf32>
    %167 = vector.shape_cast %166 : vector<1x1x32xf32> to vector<1x32xf32>
    %cst_79 = arith.constant dense<0.000000e+00> : vector<16xf32>
    %168 = vector.multi_reduction <add>, %163, %cst_79 [1] : vector<16x32xf32> to vector<16xf32>
    %169 = vector.shape_cast %168 : vector<16xf32> to vector<16x1xf32>
    %cst_80 = arith.constant 3.200000e+01 : f32
    %170 = vector.broadcast %cst_80 : f32 to vector<16x1xf32>
    %171 = arith.divf %169, %170 : vector<16x1xf32>
    %172 = vector.broadcast %171 : vector<16x1xf32> to vector<16x32xf32>
    %173 = arith.subf %163, %172 : vector<16x32xf32>
    %174 = arith.mulf %173, %173 : vector<16x32xf32>
    %cst_81 = arith.constant dense<0.000000e+00> : vector<16xf32>
    %175 = vector.multi_reduction <add>, %174, %cst_81 [1] : vector<16x32xf32> to vector<16xf32>
    %176 = vector.shape_cast %175 : vector<16xf32> to vector<16x1xf32>
    %cst_82 = arith.constant 3.100000e+01 : f32
    %177 = vector.broadcast %cst_82 : f32 to vector<16x1xf32>
    %178 = arith.divf %176, %177 : vector<16x1xf32>
    %179 = vector.broadcast %171 : vector<16x1xf32> to vector<16x32xf32>
    %180 = arith.subf %163, %179 : vector<16x32xf32>
    %181 = vector.broadcast %165 : vector<1x32xf32> to vector<16x32xf32>
    %182 = arith.mulf %181, %180 : vector<16x32xf32>
    %183 = math.sqrt %178 : vector<16x1xf32>
    %cst_83 = arith.constant 9.99999997E-7 : f32
    %184 = vector.broadcast %cst_83 : f32 to vector<16x1xf32>
    %185 = arith.addf %183, %184 : vector<16x1xf32>
    %186 = vector.broadcast %185 : vector<16x1xf32> to vector<16x32xf32>
    %187 = arith.divf %182, %186 : vector<16x32xf32>
    %188 = vector.broadcast %167 : vector<1x32xf32> to vector<16x32xf32>
    %189 = arith.addf %187, %188 : vector<16x32xf32>
    %c1_84 = arith.constant 1 : index
    %c0_85 = arith.constant 0 : index
    %c0_86 = arith.constant 0 : index
    %190 = vector.load %arg4[%c1_84, %c0_85, %c0_86] : memref<2x32x96xf32, #tpu.memory_space<vmem>>, vector<1x32x96xf32>
    %191 = vector.shape_cast %190 : vector<1x32x96xf32> to vector<32x96xf32>
    %cst_87 = arith.constant dense<0.000000e+00> : vector<16x96xf32>
    %192 = tpu.matmul %189, %191, %cst_87 {dimension_numbers = #tpu.dot_dimension_numbers<[1], [0], [0], [1], [0, 0, 1, 1], [], []>} : vector<16x32xf32>, vector<32x96xf32>, vector<16x96xf32> -> vector<16x96xf32>
    %c1_88 = arith.constant 1 : index
    %c0_89 = arith.constant 0 : index
    %c0_90 = arith.constant 0 : index
    %193 = vector.load %arg5[%c1_88, %c0_89, %c0_90] : memref<2x1x96xf32, #tpu.memory_space<vmem>>, vector<1x1x96xf32>
    %194 = vector.shape_cast %193 : vector<1x1x96xf32> to vector<1x96xf32>
    %195 = vector.broadcast %194 : vector<1x96xf32> to vector<16x96xf32>
    %196 = arith.addf %192, %195 : vector<16x96xf32>
    %197 = vector.extract_strided_slice %196 {offsets = [0, 0], sizes = [16, 32], strides = [1, 1]} : vector<16x96xf32> to vector<16x32xf32>
    %198 = vector.shape_cast %197 : vector<16x32xf32> to vector<2x8x32xf32>
    %199 = vector.extract_strided_slice %196 {offsets = [0, 32], sizes = [16, 32], strides = [1, 1]} : vector<16x96xf32> to vector<16x32xf32>
    %200 = vector.shape_cast %199 : vector<16x32xf32> to vector<2x8x32xf32>
    %201 = vector.extract_strided_slice %196 {offsets = [0, 64], sizes = [16, 32], strides = [1, 1]} : vector<16x96xf32> to vector<16x32xf32>
    %202 = vector.shape_cast %201 : vector<16x32xf32> to vector<2x8x32xf32>
    %203 = vector.extract_strided_slice %198 {offsets = [0, 0, 0], sizes = [2, 8, 8], strides = [1, 1, 1]} : vector<2x8x32xf32> to vector<2x8x8xf32>
    %204 = vector.extract_strided_slice %200 {offsets = [0, 0, 0], sizes = [2, 8, 8], strides = [1, 1, 1]} : vector<2x8x32xf32> to vector<2x8x8xf32>
    "tpu.trace_start"() <{level = 10 : i32, message = "bqd,bkd->bqk"}> : () -> ()
    %cst_91 = arith.constant dense<0.000000e+00> : vector<2x8x8xf32>
    %205 = tpu.matmul %203, %204, %cst_91 {dimension_numbers = #tpu.dot_dimension_numbers<[2], [2], [1], [1], [0, 0, 0, 1, 1, 1], [0], [0]>} : vector<2x8x8xf32>, vector<2x8x8xf32>, vector<2x8x8xf32> -> vector<2x8x8xf32>
    "tpu.trace_stop"() : () -> ()
    %206 = vector.broadcast %7 : vector<2x1x8xf32> to vector<2x8x8xf32>
    %207 = arith.addf %205, %206 : vector<2x8x8xf32>
    %cst_92 = arith.constant dense<0xFF800000> : vector<2x8xf32>
    %208 = vector.multi_reduction <maximumf>, %207, %cst_92 [2] : vector<2x8x8xf32> to vector<2x8xf32>
    %209 = vector.shape_cast %208 : vector<2x8xf32> to vector<2x8x1xf32>
    %210 = vector.broadcast %209 : vector<2x8x1xf32> to vector<2x8x8xf32>
    %211 = arith.subf %207, %210 : vector<2x8x8xf32>
    %212 = math.exp %211 : vector<2x8x8xf32>
    %cst_93 = arith.constant dense<0.000000e+00> : vector<2x8xf32>
    %213 = vector.multi_reduction <add>, %212, %cst_93 [2] : vector<2x8x8xf32> to vector<2x8xf32>
    %214 = vector.shape_cast %213 : vector<2x8xf32> to vector<2x8x1xf32>
    %215 = vector.broadcast %214 : vector<2x8x1xf32> to vector<2x8x8xf32>
    %216 = arith.divf %212, %215 : vector<2x8x8xf32>
    %217 = vector.extract_strided_slice %202 {offsets = [0, 0, 0], sizes = [2, 8, 8], strides = [1, 1, 1]} : vector<2x8x32xf32> to vector<2x8x8xf32>
    "tpu.trace_start"() <{level = 10 : i32, message = "bqk,bkd->bqd"}> : () -> ()
    %cst_94 = arith.constant dense<0.000000e+00> : vector<2x8x8xf32>
    %218 = tpu.matmul %216, %217, %cst_94 {dimension_numbers = #tpu.dot_dimension_numbers<[2], [1], [1], [2], [0, 0, 0, 1, 1, 2], [0], [0]>} : vector<2x8x8xf32>, vector<2x8x8xf32>, vector<2x8x8xf32> -> vector<2x8x8xf32>
    "tpu.trace_stop"() : () -> ()
    %219 = vector.extract_strided_slice %198 {offsets = [0, 0, 8], sizes = [2, 8, 8], strides = [1, 1, 1]} : vector<2x8x32xf32> to vector<2x8x8xf32>
    %220 = vector.extract_strided_slice %200 {offsets = [0, 0, 8], sizes = [2, 8, 8], strides = [1, 1, 1]} : vector<2x8x32xf32> to vector<2x8x8xf32>
    "tpu.trace_start"() <{level = 10 : i32, message = "bqd,bkd->bqk"}> : () -> ()
    %cst_95 = arith.constant dense<0.000000e+00> : vector<2x8x8xf32>
    %221 = tpu.matmul %219, %220, %cst_95 {dimension_numbers = #tpu.dot_dimension_numbers<[2], [2], [1], [1], [0, 0, 0, 1, 1, 1], [0], [0]>} : vector<2x8x8xf32>, vector<2x8x8xf32>, vector<2x8x8xf32> -> vector<2x8x8xf32>
    "tpu.trace_stop"() : () -> ()
    %222 = vector.broadcast %7 : vector<2x1x8xf32> to vector<2x8x8xf32>
    %223 = arith.addf %221, %222 : vector<2x8x8xf32>
    %cst_96 = arith.constant dense<0xFF800000> : vector<2x8xf32>
    %224 = vector.multi_reduction <maximumf>, %223, %cst_96 [2] : vector<2x8x8xf32> to vector<2x8xf32>
    %225 = vector.shape_cast %224 : vector<2x8xf32> to vector<2x8x1xf32>
    %226 = vector.broadcast %225 : vector<2x8x1xf32> to vector<2x8x8xf32>
    %227 = arith.subf %223, %226 : vector<2x8x8xf32>
    %228 = math.exp %227 : vector<2x8x8xf32>
    %cst_97 = arith.constant dense<0.000000e+00> : vector<2x8xf32>
    %229 = vector.multi_reduction <add>, %228, %cst_97 [2] : vector<2x8x8xf32> to vector<2x8xf32>
    %230 = vector.shape_cast %229 : vector<2x8xf32> to vector<2x8x1xf32>
    %231 = vector.broadcast %230 : vector<2x8x1xf32> to vector<2x8x8xf32>
    %232 = arith.divf %228, %231 : vector<2x8x8xf32>
    %233 = vector.extract_strided_slice %202 {offsets = [0, 0, 8], sizes = [2, 8, 8], strides = [1, 1, 1]} : vector<2x8x32xf32> to vector<2x8x8xf32>
    "tpu.trace_start"() <{level = 10 : i32, message = "bqk,bkd->bqd"}> : () -> ()
    %cst_98 = arith.constant dense<0.000000e+00> : vector<2x8x8xf32>
    %234 = tpu.matmul %232, %233, %cst_98 {dimension_numbers = #tpu.dot_dimension_numbers<[2], [1], [1], [2], [0, 0, 0, 1, 1, 2], [0], [0]>} : vector<2x8x8xf32>, vector<2x8x8xf32>, vector<2x8x8xf32> -> vector<2x8x8xf32>
    "tpu.trace_stop"() : () -> ()
    %235 = vector.extract_strided_slice %198 {offsets = [0, 0, 16], sizes = [2, 8, 8], strides = [1, 1, 1]} : vector<2x8x32xf32> to vector<2x8x8xf32>
    %236 = vector.extract_strided_slice %200 {offsets = [0, 0, 16], sizes = [2, 8, 8], strides = [1, 1, 1]} : vector<2x8x32xf32> to vector<2x8x8xf32>
    "tpu.trace_start"() <{level = 10 : i32, message = "bqd,bkd->bqk"}> : () -> ()
    %cst_99 = arith.constant dense<0.000000e+00> : vector<2x8x8xf32>
    %237 = tpu.matmul %235, %236, %cst_99 {dimension_numbers = #tpu.dot_dimension_numbers<[2], [2], [1], [1], [0, 0, 0, 1, 1, 1], [0], [0]>} : vector<2x8x8xf32>, vector<2x8x8xf32>, vector<2x8x8xf32> -> vector<2x8x8xf32>
    "tpu.trace_stop"() : () -> ()
    %238 = vector.broadcast %7 : vector<2x1x8xf32> to vector<2x8x8xf32>
    %239 = arith.addf %237, %238 : vector<2x8x8xf32>
    %cst_100 = arith.constant dense<0xFF800000> : vector<2x8xf32>
    %240 = vector.multi_reduction <maximumf>, %239, %cst_100 [2] : vector<2x8x8xf32> to vector<2x8xf32>
    %241 = vector.shape_cast %240 : vector<2x8xf32> to vector<2x8x1xf32>
    %242 = vector.broadcast %241 : vector<2x8x1xf32> to vector<2x8x8xf32>
    %243 = arith.subf %239, %242 : vector<2x8x8xf32>
    %244 = math.exp %243 : vector<2x8x8xf32>
    %cst_101 = arith.constant dense<0.000000e+00> : vector<2x8xf32>
    %245 = vector.multi_reduction <add>, %244, %cst_101 [2] : vector<2x8x8xf32> to vector<2x8xf32>
    %246 = vector.shape_cast %245 : vector<2x8xf32> to vector<2x8x1xf32>
    %247 = vector.broadcast %246 : vector<2x8x1xf32> to vector<2x8x8xf32>
    %248 = arith.divf %244, %247 : vector<2x8x8xf32>
    %249 = vector.extract_strided_slice %202 {offsets = [0, 0, 16], sizes = [2, 8, 8], strides = [1, 1, 1]} : vector<2x8x32xf32> to vector<2x8x8xf32>
    "tpu.trace_start"() <{level = 10 : i32, message = "bqk,bkd->bqd"}> : () -> ()
    %cst_102 = arith.constant dense<0.000000e+00> : vector<2x8x8xf32>
    %250 = tpu.matmul %248, %249, %cst_102 {dimension_numbers = #tpu.dot_dimension_numbers<[2], [1], [1], [2], [0, 0, 0, 1, 1, 2], [0], [0]>} : vector<2x8x8xf32>, vector<2x8x8xf32>, vector<2x8x8xf32> -> vector<2x8x8xf32>
    "tpu.trace_stop"() : () -> ()
    %251 = vector.extract_strided_slice %198 {offsets = [0, 0, 24], sizes = [2, 8, 8], strides = [1, 1, 1]} : vector<2x8x32xf32> to vector<2x8x8xf32>
    %252 = vector.extract_strided_slice %200 {offsets = [0, 0, 24], sizes = [2, 8, 8], strides = [1, 1, 1]} : vector<2x8x32xf32> to vector<2x8x8xf32>
    "tpu.trace_start"() <{level = 10 : i32, message = "bqd,bkd->bqk"}> : () -> ()
    %cst_103 = arith.constant dense<0.000000e+00> : vector<2x8x8xf32>
    %253 = tpu.matmul %251, %252, %cst_103 {dimension_numbers = #tpu.dot_dimension_numbers<[2], [2], [1], [1], [0, 0, 0, 1, 1, 1], [0], [0]>} : vector<2x8x8xf32>, vector<2x8x8xf32>, vector<2x8x8xf32> -> vector<2x8x8xf32>
    "tpu.trace_stop"() : () -> ()
    %254 = vector.broadcast %7 : vector<2x1x8xf32> to vector<2x8x8xf32>
    %255 = arith.addf %253, %254 : vector<2x8x8xf32>
    %cst_104 = arith.constant dense<0xFF800000> : vector<2x8xf32>
    %256 = vector.multi_reduction <maximumf>, %255, %cst_104 [2] : vector<2x8x8xf32> to vector<2x8xf32>
    %257 = vector.shape_cast %256 : vector<2x8xf32> to vector<2x8x1xf32>
    %258 = vector.broadcast %257 : vector<2x8x1xf32> to vector<2x8x8xf32>
    %259 = arith.subf %255, %258 : vector<2x8x8xf32>
    %260 = math.exp %259 : vector<2x8x8xf32>
    %cst_105 = arith.constant dense<0.000000e+00> : vector<2x8xf32>
    %261 = vector.multi_reduction <add>, %260, %cst_105 [2] : vector<2x8x8xf32> to vector<2x8xf32>
    %262 = vector.shape_cast %261 : vector<2x8xf32> to vector<2x8x1xf32>
    %263 = vector.broadcast %262 : vector<2x8x1xf32> to vector<2x8x8xf32>
    %264 = arith.divf %260, %263 : vector<2x8x8xf32>
    %265 = vector.extract_strided_slice %202 {offsets = [0, 0, 24], sizes = [2, 8, 8], strides = [1, 1, 1]} : vector<2x8x32xf32> to vector<2x8x8xf32>
    "tpu.trace_start"() <{level = 10 : i32, message = "bqk,bkd->bqd"}> : () -> ()
    %cst_106 = arith.constant dense<0.000000e+00> : vector<2x8x8xf32>
    %266 = tpu.matmul %264, %265, %cst_106 {dimension_numbers = #tpu.dot_dimension_numbers<[2], [1], [1], [2], [0, 0, 0, 1, 1, 2], [0], [0]>} : vector<2x8x8xf32>, vector<2x8x8xf32>, vector<2x8x8xf32> -> vector<2x8x8xf32>
    "tpu.trace_stop"() : () -> ()
    %267 = tpu.concatenate %218, %234, %250, %266 in 2 : vector<2x8x8xf32>, vector<2x8x8xf32>, vector<2x8x8xf32>, vector<2x8x8xf32> -> vector<2x8x32xf32>
    %268 = vector.shape_cast %267 : vector<2x8x32xf32> to vector<16x32xf32>
    %c1_107 = arith.constant 1 : index
    %c0_108 = arith.constant 0 : index
    %c0_109 = arith.constant 0 : index
    %269 = vector.load %arg6[%c1_107, %c0_108, %c0_109] : memref<2x32x32xf32, #tpu.memory_space<vmem>>, vector<1x32x32xf32>
    %270 = vector.shape_cast %269 : vector<1x32x32xf32> to vector<32x32xf32>
    %cst_110 = arith.constant dense<0.000000e+00> : vector<16x32xf32>
    %271 = tpu.matmul %268, %270, %cst_110 {dimension_numbers = #tpu.dot_dimension_numbers<[1], [0], [0], [1], [0, 0, 1, 1], [], []>} : vector<16x32xf32>, vector<32x32xf32>, vector<16x32xf32> -> vector<16x32xf32>
    %c1_111 = arith.constant 1 : index
    %c0_112 = arith.constant 0 : index
    %c0_113 = arith.constant 0 : index
    %272 = vector.load %arg7[%c1_111, %c0_112, %c0_113] : memref<2x1x32xf32, #tpu.memory_space<vmem>>, vector<1x1x32xf32>
    %273 = vector.shape_cast %272 : vector<1x1x32xf32> to vector<1x32xf32>
    %274 = vector.broadcast %273 : vector<1x32xf32> to vector<16x32xf32>
    %275 = arith.addf %271, %274 : vector<16x32xf32>
    %276 = arith.addf %163, %275 : vector<16x32xf32>
    %c1_114 = arith.constant 1 : index
    %c0_115 = arith.constant 0 : index
    %c0_116 = arith.constant 0 : index
    %277 = vector.load %arg8[%c1_114, %c0_115, %c0_116] : memref<2x1x32xf32, #tpu.memory_space<vmem>>, vector<1x1x32xf32>
    %278 = vector.shape_cast %277 : vector<1x1x32xf32> to vector<1x32xf32>
    %c1_117 = arith.constant 1 : index
    %c0_118 = arith.constant 0 : index
    %c0_119 = arith.constant 0 : index
    %279 = vector.load %arg9[%c1_117, %c0_118, %c0_119] : memref<2x1x32xf32, #tpu.memory_space<vmem>>, vector<1x1x32xf32>
    %280 = vector.shape_cast %279 : vector<1x1x32xf32> to vector<1x32xf32>
    %cst_120 = arith.constant dense<0.000000e+00> : vector<16xf32>
    %281 = vector.multi_reduction <add>, %276, %cst_120 [1] : vector<16x32xf32> to vector<16xf32>
    %282 = vector.shape_cast %281 : vector<16xf32> to vector<16x1xf32>
    %cst_121 = arith.constant 3.200000e+01 : f32
    %283 = vector.broadcast %cst_121 : f32 to vector<16x1xf32>
    %284 = arith.divf %282, %283 : vector<16x1xf32>
    %285 = vector.broadcast %284 : vector<16x1xf32> to vector<16x32xf32>
    %286 = arith.subf %276, %285 : vector<16x32xf32>
    %287 = arith.mulf %286, %286 : vector<16x32xf32>
    %cst_122 = arith.constant dense<0.000000e+00> : vector<16xf32>
    %288 = vector.multi_reduction <add>, %287, %cst_122 [1] : vector<16x32xf32> to vector<16xf32>
    %289 = vector.shape_cast %288 : vector<16xf32> to vector<16x1xf32>
    %cst_123 = arith.constant 3.100000e+01 : f32
    %290 = vector.broadcast %cst_123 : f32 to vector<16x1xf32>
    %291 = arith.divf %289, %290 : vector<16x1xf32>
    %292 = vector.broadcast %284 : vector<16x1xf32> to vector<16x32xf32>
    %293 = arith.subf %276, %292 : vector<16x32xf32>
    %294 = vector.broadcast %278 : vector<1x32xf32> to vector<16x32xf32>
    %295 = arith.mulf %294, %293 : vector<16x32xf32>
    %296 = math.sqrt %291 : vector<16x1xf32>
    %cst_124 = arith.constant 9.99999997E-7 : f32
    %297 = vector.broadcast %cst_124 : f32 to vector<16x1xf32>
    %298 = arith.addf %296, %297 : vector<16x1xf32>
    %299 = vector.broadcast %298 : vector<16x1xf32> to vector<16x32xf32>
    %300 = arith.divf %295, %299 : vector<16x32xf32>
    %301 = vector.broadcast %280 : vector<1x32xf32> to vector<16x32xf32>
    %302 = arith.addf %300, %301 : vector<16x32xf32>
    %c1_125 = arith.constant 1 : index
    %c0_126 = arith.constant 0 : index
    %c0_127 = arith.constant 0 : index
    %303 = vector.load %arg10[%c1_125, %c0_126, %c0_127] : memref<2x32x64xf32, #tpu.memory_space<vmem>>, vector<1x32x64xf32>
    %304 = vector.shape_cast %303 : vector<1x32x64xf32> to vector<32x64xf32>
    %cst_128 = arith.constant dense<0.000000e+00> : vector<16x64xf32>
    %305 = tpu.matmul %302, %304, %cst_128 {dimension_numbers = #tpu.dot_dimension_numbers<[1], [0], [0], [1], [0, 0, 1, 1], [], []>} : vector<16x32xf32>, vector<32x64xf32>, vector<16x64xf32> -> vector<16x64xf32>
    %c1_129 = arith.constant 1 : index
    %c0_130 = arith.constant 0 : index
    %c0_131 = arith.constant 0 : index
    %306 = vector.load %arg11[%c1_129, %c0_130, %c0_131] : memref<2x1x64xf32, #tpu.memory_space<vmem>>, vector<1x1x64xf32>
    %307 = vector.shape_cast %306 : vector<1x1x64xf32> to vector<1x64xf32>
    %308 = vector.broadcast %307 : vector<1x64xf32> to vector<16x64xf32>
    %309 = arith.addf %305, %308 : vector<16x64xf32>
    %cst_132 = arith.constant 0.000000e+00 : f32
    %310 = vector.broadcast %cst_132 : f32 to vector<16x64xf32>
    %311 = arith.maximumf %309, %310 : vector<16x64xf32>
    %c1_133 = arith.constant 1 : index
    %c0_134 = arith.constant 0 : index
    %c0_135 = arith.constant 0 : index
    %312 = vector.load %arg12[%c1_133, %c0_134, %c0_135] : memref<2x64x32xf32, #tpu.memory_space<vmem>>, vector<1x64x32xf32>
    %313 = vector.shape_cast %312 : vector<1x64x32xf32> to vector<64x32xf32>
    %cst_136 = arith.constant dense<0.000000e+00> : vector<16x32xf32>
    %314 = tpu.matmul %311, %313, %cst_136 {dimension_numbers = #tpu.dot_dimension_numbers<[1], [0], [0], [1], [0, 0, 1, 1], [], []>} : vector<16x64xf32>, vector<64x32xf32>, vector<16x32xf32> -> vector<16x32xf32>
    %c1_137 = arith.constant 1 : index
    %c0_138 = arith.constant 0 : index
    %c0_139 = arith.constant 0 : index
    %315 = vector.load %arg13[%c1_137, %c0_138, %c0_139] : memref<2x1x32xf32, #tpu.memory_space<vmem>>, vector<1x1x32xf32>
    %316 = vector.shape_cast %315 : vector<1x1x32xf32> to vector<1x32xf32>
    %317 = vector.broadcast %316 : vector<1x32xf32> to vector<16x32xf32>
    %318 = arith.addf %314, %317 : vector<16x32xf32>
    %319 = arith.addf %276, %318 : vector<16x32xf32>
    %c0_140 = arith.constant 0 : index
    %c0_141 = arith.constant 0 : index
    %320 = vector.load %arg14[%c0_140, %c0_141] : memref<1x32xf32, #tpu.memory_space<vmem>>, vector<1x32xf32>
    %c0_142 = arith.constant 0 : index
    %c0_143 = arith.constant 0 : index
    %321 = vector.load %arg15[%c0_142, %c0_143] : memref<1x32xf32, #tpu.memory_space<vmem>>, vector<1x32xf32>
    %cst_144 = arith.constant dense<0.000000e+00> : vector<16xf32>
    %322 = vector.multi_reduction <add>, %319, %cst_144 [1] : vector<16x32xf32> to vector<16xf32>
    %323 = vector.shape_cast %322 : vector<16xf32> to vector<16x1xf32>
    %cst_145 = arith.constant 3.200000e+01 : f32
    %324 = vector.broadcast %cst_145 : f32 to vector<16x1xf32>
    %325 = arith.divf %323, %324 : vector<16x1xf32>
    %326 = vector.broadcast %325 : vector<16x1xf32> to vector<16x32xf32>
    %327 = arith.subf %319, %326 : vector<16x32xf32>
    %328 = arith.mulf %327, %327 : vector<16x32xf32>
    %cst_146 = arith.constant dense<0.000000e+00> : vector<16xf32>
    %329 = vector.multi_reduction <add>, %328, %cst_146 [1] : vector<16x32xf32> to vector<16xf32>
    %330 = vector.shape_cast %329 : vector<16xf32> to vector<16x1xf32>
    %cst_147 = arith.constant 3.100000e+01 : f32
    %331 = vector.broadcast %cst_147 : f32 to vector<16x1xf32>
    %332 = arith.divf %330, %331 : vector<16x1xf32>
    %333 = vector.broadcast %325 : vector<16x1xf32> to vector<16x32xf32>
    %334 = arith.subf %319, %333 : vector<16x32xf32>
    %335 = vector.broadcast %320 : vector<1x32xf32> to vector<16x32xf32>
    %336 = arith.mulf %335, %334 : vector<16x32xf32>
    %337 = math.sqrt %332 : vector<16x1xf32>
    %cst_148 = arith.constant 9.99999997E-7 : f32
    %338 = vector.broadcast %cst_148 : f32 to vector<16x1xf32>
    %339 = arith.addf %337, %338 : vector<16x1xf32>
    %340 = vector.broadcast %339 : vector<16x1xf32> to vector<16x32xf32>
    %341 = arith.divf %336, %340 : vector<16x32xf32>
    %342 = vector.broadcast %321 : vector<1x32xf32> to vector<16x32xf32>
    %343 = arith.addf %341, %342 : vector<16x32xf32>
    %344 = vector.shape_cast %343 : vector<16x32xf32> to vector<2x8x32xf32>
    %c0_149 = arith.constant 0 : index
    %c0_150 = arith.constant 0 : index
    %c0_151 = arith.constant 0 : index
    %345 = vector.load %arg16[%c0_149, %c0_150, %c0_151] : memref<2x8x32xf32, #tpu.memory_space<vmem>>, vector<2x8x32xf32>
    tpu.vector_store %arg16[%c0_149, %c0_150, %c0_151], %344 {strides = array<i32>} : memref<2x8x32xf32, #tpu.memory_space<vmem>>, vector<2x8x32xf32>,
    return
  }
}

</mosaic_0001>

<llo_original>
// kernel: tpu_custom_call.1
$region0: #{tpu_custom_call.1}
  #allocation0 [shape = 'u32[]', space=smem, size = 0x4, offset = 0x4, fixed_abs, tag = 'smem constant byte address 0x4 - core index']
  #allocation1 [shape = 'u32[72,128]{1,0:T(1,128)}', space=vmem, size = 0x9000, scoped, tag = 'internal scratch']
  %s0 = inlined_call_operand.hbm [shape: f32[2,8,32], index: 0, kind: input, shape index: {}]
  %s1 = inlined_call_operand.hbm [shape: f32[2,1,8], index: 1, kind: input, shape index: {}]
  %s2 = inlined_call_operand.hbm [shape: f32[2,1,32], index: 2, kind: input, shape index: {}]
  %s3 = inlined_call_operand.vmem [shape: f32[2,1,32], index: 3, kind: input, shape index: {}]
  %s4 = inlined_call_operand.vmem [shape: f32[2,32,96], index: 4, kind: input, shape index: {}]
  %s5 = inlined_call_operand.hbm [shape: f32[2,1,96], index: 5, kind: input, shape index: {}]
  %s6 = inlined_call_operand.vmem [shape: f32[2,32,32], index: 6, kind: input, shape index: {}]
  %s7 = inlined_call_operand.vmem [shape: f32[2,1,32], index: 7, kind: input, shape index: {}]
  %s8 = inlined_call_operand.hbm [shape: f32[2,1,32], index: 8, kind: input, shape index: {}]
  %s9 = inlined_call_operand.vmem [shape: f32[2,1,32], index: 9, kind: input, shape index: {}]
  %s10 = inlined_call_operand.vmem [shape: f32[2,32,64], index: 10, kind: input, shape index: {}]
  %s11 = inlined_call_operand.vmem [shape: f32[2,1,64], index: 11, kind: input, shape index: {}]
  %s12 = inlined_call_operand.vmem [shape: f32[2,64,32], index: 12, kind: input, shape index: {}]
  %s13 = inlined_call_operand.vmem [shape: f32[2,1,32], index: 13, kind: input, shape index: {}]
  %s14 = inlined_call_operand.vmem [shape: f32[1,32], index: 14, kind: input, shape index: {}]
  %s15 = inlined_call_operand.vmem [shape: f32[1,32], index: 15, kind: input, shape index: {}]
  %s16 = inlined_call_operand.hbm [shape: f32[2,8,32], index: 16, kind: output, shape index: {}]
  %s17 = sld [smem:[#allocation0]]
  $region94: #{tpu_custom_call.1} parent=0
    _
  %s19 = ssub.s32 1, %s17
  %s20 = scalar_select 0, %s19, %s17
  $region1: #{tpu_custom_call.1} parent=0
    #allocation2 [shape = 'u8[8192]{0}', space=vmem, size = 0x2000, scoped, tag = 'input window, operand 0, single buffered']
    #allocation3 [shape = 's32[1]{0}', space=sflag, size = 0x4, scoped, tag = 'scoped memory for tpu_custom_call.1']
    #allocation4 [shape = 's32[1]{0}', space=sflag, size = 0x4, scoped, tag = 'scoped memory for tpu_custom_call.1']
    #allocation5 [shape = 'u8[1024]{0}', space=vmem, size = 0x400, scoped, tag = 'input window, operand 1, single buffered']
    #allocation6 [shape = 's32[1]{0}', space=sflag, size = 0x4, scoped, tag = 'scoped memory for tpu_custom_call.1']
    #allocation7 [shape = 'u8[1024]{0}', space=vmem, size = 0x400, scoped, tag = 'input window, operand 2, single buffered']
    #allocation8 [shape = 'u8[1024]{0}', space=vmem, size = 0x400, scoped, tag = 'input window, operand 5, single buffered']
    #allocation9 [shape = 's32[1]{0}', space=sflag, size = 0x4, scoped, tag = 'scoped memory for tpu_custom_call.1']
    #allocation10 [shape = 'u8[1024]{0}', space=vmem, size = 0x400, scoped, tag = 'input window, operand 8, single buffered']
    #allocation11 [shape = 'u8[8192]{0}', space=vmem, size = 0x2000, scoped, tag = 'output window, operand 0, single buffered']
    %21 = vsyncpa [#allocation3], 0
    %22 = vsyncpa [#allocation6], 0
    %23 = vsyncpa [#allocation9], 0
    %24 = vsyncpa [#allocation4], 0
    // Predicated region
    $region2: #{tpu_custom_call.1} parent=1 // pred_check
      _
    $region3: #{tpu_custom_call.1} parent=1 // pred_check_branch
      %26 = sbr.rel (0) target = $region5
    $region4: #{tpu_custom_call.1} parent=1 // pred_region
      %28 = vsyncadd [#allocation3], 0
      %s29 = sshll.u32 %s0, 4
      %s30 = int_to_ptr.hbm [resolvable:$true] %s29
      %s31 = sshll.u32 [#allocation2], 4
      %s32 = int_to_ptr.vmem [resolvable:$true] %s31
      %37 = dma.hbm_to_vmem [thread:$0]  %s30, 256, %s32, [#allocation3], 128, 128, 8
    $region5: #{tpu_custom_call.1} parent=1 // pred_fallthru
      _
    // Predicated region
    $region6: #{tpu_custom_call.1} parent=1 // pred_check
      _
    $region7: #{tpu_custom_call.1} parent=1 // pred_check_branch
      %39 = sbr.rel (0) target = $region9
    $region8: #{tpu_custom_call.1} parent=1 // pred_region
      %41 = vsyncadd [#allocation6], 0
      %s42 = sshll.u32 %s1, 4
      %s43 = int_to_ptr.hbm [resolvable:$true] %s42
      %s44 = sshll.u32 [#allocation5], 4
      %s45 = int_to_ptr.vmem [resolvable:$true] %s44
      %50 = dma.hbm_to_vmem [thread:$0]  %s43, 32, %s45, [#allocation6], 16, 16, 1
    $region9: #{tpu_custom_call.1} parent=1 // pred_fallthru
      _
    // Predicated region
    $region10: #{tpu_custom_call.1} parent=1 // pred_check
      _
    $region11: #{tpu_custom_call.1} parent=1 // pred_check_branch
      %52 = sbr.rel (0) target = $region13
    $region12: #{tpu_custom_call.1} parent=1 // pred_region
      %54 = vsyncadd [#allocation6], 0
      %s55 = sshll.u32 %s2, 4
      %s56 = int_to_ptr.hbm [resolvable:$true] %s55
      %s57 = sshll.u32 [#allocation7], 4
      %s58 = int_to_ptr.vmem [resolvable:$true] %s57
      %63 = dma.hbm_to_vmem [thread:$0]  %s56, 32, %s58, [#allocation6], 16, 16, 1
    $region13: #{tpu_custom_call.1} parent=1 // pred_fallthru
      _
    // Predicated region
    $region14: #{tpu_custom_call.1} parent=1 // pred_check
      _
    $region15: #{tpu_custom_call.1} parent=1 // pred_check_branch
      %65 = sbr.rel (0) target = $region17
    $region16: #{tpu_custom_call.1} parent=1 // pred_region
      _
    $region17: #{tpu_custom_call.1} parent=1 // pred_fallthru
      _
    // Predicated region
    $region18: #{tpu_custom_call.1} parent=1 // pred_check
      _
    $region19: #{tpu_custom_call.1} parent=1 // pred_check_branch
      %67 = sbr.rel (0) target = $region21
    $region20: #{tpu_custom_call.1} parent=1 // pred_region
      _
    $region21: #{tpu_custom_call.1} parent=1 // pred_fallthru
      _
    // Predicated region
    $region22: #{tpu_custom_call.1} parent=1 // pred_check
      _
    $region23: #{tpu_custom_call.1} parent=1 // pred_check_branch
      %69 = sbr.rel (0) target = $region25
    $region24: #{tpu_custom_call.1} parent=1 // pred_region
      %71 = vsyncadd [#allocation9], 0
      %s72 = sshll.u32 %s5, 4
      %s73 = int_to_ptr.hbm [resolvable:$true] %s72
      %s74 = sshll.u32 [#allocation8], 4
      %s75 = int_to_ptr.vmem [resolvable:$true] %s74
      %80 = dma.hbm_to_vmem [thread:$0]  %s73, 32, %s75, [#allocation9], 16, 16, 1
    $region25: #{tpu_custom_call.1} parent=1 // pred_fallthru
      _
    // Predicated region
    $region26: #{tpu_custom_call.1} parent=1 // pred_check
      _
    $region27: #{tpu_custom_call.1} parent=1 // pred_check_branch
      %82 = sbr.rel (0) target = $region29
    $region28: #{tpu_custom_call.1} parent=1 // pred_region
      _
    $region29: #{tpu_custom_call.1} parent=1 // pred_fallthru
      _
    // Predicated region
    $region30: #{tpu_custom_call.1} parent=1 // pred_check
      _
    $region31: #{tpu_custom_call.1} parent=1 // pred_check_branch
      %84 = sbr.rel (0) target = $region33
    $region32: #{tpu_custom_call.1} parent=1 // pred_region
      _
    $region33: #{tpu_custom_call.1} parent=1 // pred_fallthru
      _
    // Predicated region
    $region34: #{tpu_custom_call.1} parent=1 // pred_check
      _
    $region35: #{tpu_custom_call.1} parent=1 // pred_check_branch
      %86 = sbr.rel (0) target = $region37
    $region36: #{tpu_custom_call.1} parent=1 // pred_region
      %88 = vsyncadd [#allocation9], 0
      %s89 = sshll.u32 %s8, 4
      %s90 = int_to_ptr.hbm [resolvable:$true] %s89
      %s91 = sshll.u32 [#allocation10], 4
      %s92 = int_to_ptr.vmem [resolvable:$true] %s91
      %97 = dma.hbm_to_vmem [thread:$0]  %s90, 32, %s92, [#allocation9], 16, 16, 1
    $region37: #{tpu_custom_call.1} parent=1 // pred_fallthru
      _
    // Predicated region
    $region38: #{tpu_custom_call.1} parent=1 // pred_check
      _
    $region39: #{tpu_custom_call.1} parent=1 // pred_check_branch
      %99 = sbr.rel (0) target = $region41
    $region40: #{tpu_custom_call.1} parent=1 // pred_region
      _
    $region41: #{tpu_custom_call.1} parent=1 // pred_fallthru
      _
    // Predicated region
    $region42: #{tpu_custom_call.1} parent=1 // pred_check
      _
    $region43: #{tpu_custom_call.1} parent=1 // pred_check_branch
      %101 = sbr.rel (0) target = $region45
    $region44: #{tpu_custom_call.1} parent=1 // pred_region
      _
    $region45: #{tpu_custom_call.1} parent=1 // pred_fallthru
      _
    // Predicated region
    $region46: #{tpu_custom_call.1} parent=1 // pred_check
      _
    $region47: #{tpu_custom_call.1} parent=1 // pred_check_branch
      %103 = sbr.rel (0) target = $region49
    $region48: #{tpu_custom_call.1} parent=1 // pred_region
      _
    $region49: #{tpu_custom_call.1} parent=1 // pred_fallthru
      _
    // Predicated region
    $region50: #{tpu_custom_call.1} parent=1 // pred_check
      _
    $region51: #{tpu_custom_call.1} parent=1 // pred_check_branch
      %105 = sbr.rel (0) target = $region53
    $region52: #{tpu_custom_call.1} parent=1 // pred_region
      _
    $region53: #{tpu_custom_call.1} parent=1 // pred_fallthru
      _
    // Predicated region
    $region54: #{tpu_custom_call.1} parent=1 // pred_check
      _
    $region55: #{tpu_custom_call.1} parent=1 // pred_check_branch
      %107 = sbr.rel (0) target = $region57
    $region56: #{tpu_custom_call.1} parent=1 // pred_region
      _
    $region57: #{tpu_custom_call.1} parent=1 // pred_fallthru
      _
    // Predicated region
    $region58: #{tpu_custom_call.1} parent=1 // pred_check
      _
    $region59: #{tpu_custom_call.1} parent=1 // pred_check_branch
      %109 = sbr.rel (0) target = $region61
    $region60: #{tpu_custom_call.1} parent=1 // pred_region
      _
    $region61: #{tpu_custom_call.1} parent=1 // pred_fallthru
      _
    // Predicated region
    $region62: #{tpu_custom_call.1} parent=1 // pred_check
      _
    $region63: #{tpu_custom_call.1} parent=1 // pred_check_branch
      %111 = sbr.rel (0) target = $region65
    $region64: #{tpu_custom_call.1} parent=1 // pred_region
      _
    $region65: #{tpu_custom_call.1} parent=1 // pred_fallthru
      _
    // Predicated region
    $region66: #{tpu_custom_call.1} parent=1 // pred_check
      _
    $region67: #{tpu_custom_call.1} parent=1 // pred_check_branch
      %113 = sbr.rel (0) target = $region69
    $region68: #{tpu_custom_call.1} parent=1 // pred_region
      %115 = dma.done [#allocation3], 256
    $region69: #{tpu_custom_call.1} parent=1 // pred_fallthru
      _
    // Predicated region
    $region70: #{tpu_custom_call.1} parent=1 // pred_check
      _
    $region71: #{tpu_custom_call.1} parent=1 // pred_check_branch
      %117 = sbr.rel (0) target = $region73
    $region72: #{tpu_custom_call.1} parent=1 // pred_region
      %119 = dma.done [#allocation6], 32
    $region73: #{tpu_custom_call.1} parent=1 // pred_fallthru
      _
    // Predicated region
    $region74: #{tpu_custom_call.1} parent=1 // pred_check
      _
    $region75: #{tpu_custom_call.1} parent=1 // pred_check_branch
      %121 = sbr.rel (0) target = $region77
    $region76: #{tpu_custom_call.1} parent=1 // pred_region
      %123 = dma.done [#allocation6], 32
    $region77: #{tpu_custom_call.1} parent=1 // pred_fallthru
      _
    // Predicated region
    $region78: #{tpu_custom_call.1} parent=1 // pred_check
      _
    $region79: #{tpu_custom_call.1} parent=1 // pred_check_branch
      %125 = sbr.rel (0) target = $region81
    $region80: #{tpu_custom_call.1} parent=1 // pred_region
      %127 = dma.done [#allocation9], 32
    $region81: #{tpu_custom_call.1} parent=1 // pred_fallthru
      _
    // Predicated region
    $region82: #{tpu_custom_call.1} parent=1 // pred_check
      _
    $region83: #{tpu_custom_call.1} parent=1 // pred_check_branch
      %129 = sbr.rel (0) target = $region85
    $region84: #{tpu_custom_call.1} parent=1 // pred_region
      %131 = dma.done [#allocation9], 32
    $region85: #{tpu_custom_call.1} parent=1 // pred_fallthru
      _
    %v132 = vld [vmem:[#allocation2] sm:$0xff]
    %v133 = vld [vmem:[#allocation2 + $0x8] sm:$0xff]
    %v134 = vld [vmem:[#allocation5] sm:$0x1]
    %v135 = vld [vmem:[#allocation5 + $0x1] sm:$0x1]
    %vm136 = vcmp.lt.f32.partialorder %v134, 0.5
    %vm137 = vcmp.lt.f32.partialorder %v135, 0.5
    %v138 = vsel %vm136, -1e+09, 0.0
    %v139 = vsel %vm137, -1e+09, 0.0
    %v140 = vld [vmem:[#allocation7] sm:$0x1]
    %v141 = vld [vmem:[%s3] sm:$0x1]
    %vm142 = vcmask 261120
    %v143 = vsel %vm142, %v132, 0.0
    %144 = vadd.xlane.f32.xlu0 %v143
    %v145 = vpop.xlane.xlu0 %144
    %v146 = vsel %vm142, %v133, 0.0
    %147 = vadd.xlane.f32.xlu0 %v146
    %v148 = vpop.xlane.xlu0 %147
    %v149 = vrcp.pop 32.0
    %v150 = vmul.f32 32.0, %v149
    %v151 = vsub.f32 1.0, %v150
    %v152 = vmul.f32 %v149, %v151
    %v153 = vadd.f32 %v149, %v152
    %vm154 = vweird.f32 %v149
    %v155 = vsel %vm154, %v149, %v153
    %v156 = vmul.f32 %v145, %v155
    %v157 = vmul.f32 %v148, %v155
    %v158 = vsub.f32 %v132, %v156
    %v159 = vsub.f32 %v133, %v157
    %v160 = vmul.f32 %v158, %v158
    %v161 = vmul.f32 %v159, %v159
    %v162 = vsel %vm142, %v160, 0.0
    %163 = vadd.xlane.f32.xlu0 %v162
    %v164 = vpop.xlane.xlu0 %163
    %v165 = vsel %vm142, %v161, 0.0
    %166 = vadd.xlane.f32.xlu0 %v165
    %v167 = vpop.xlane.xlu0 %166
    %v168 = vrcp.pop 31.0
    %v169 = vmul.f32 31.0, %v168
    %v170 = vsub.f32 1.0, %v169
    %v171 = vmul.f32 %v168, %v170
    %v172 = vadd.f32 %v168, %v171
    %vm173 = vweird.f32 %v168
    %v174 = vsel %vm173, %v168, %v172
    %v175 = vmul.f32 %v164, %v174
    %v176 = vmul.f32 %v167, %v174
    %v178 = vperm.slane %v140, 0
    %v180 = vmul.f32 %v178, %v158
    %v181 = vmul.f32 %v178, %v159
    %v182 = vrsqrt.pop %v175
    %v183 = vmul.f32 %v182, %v175
    %v184 = vmul.f32 %v183, %v182
    %v185 = vmul.f32 0.5, %v184
    %v186 = vsub.f32 1.5, %v185
    %v187 = vmul.f32 %v182, %v186
    %v188 = vmul.f32 %v175, %v187
    %vm189 = vcmp.eq.f32.partialorder %v175, inf
    %v190 = vsel %vm189, %v175, %v188
    %vm191 = vcmp.eq.f32.partialorder %v175, 0.0
    %v192 = vand.u32 %v175, 2147483648
    %v193 = vsel %vm191, %v192, %v190
    %v194 = vrsqrt.pop %v176
    %v195 = vmul.f32 %v194, %v176
    %v196 = vmul.f32 %v195, %v194
    %v197 = vmul.f32 0.5, %v196
    %v198 = vsub.f32 1.5, %v197
    %v199 = vmul.f32 %v194, %v198
    %v200 = vmul.f32 %v176, %v199
    %vm201 = vcmp.eq.f32.partialorder %v176, inf
    %v202 = vsel %vm201, %v176, %v200
    %vm203 = vcmp.eq.f32.partialorder %v176, 0.0
    %v204 = vand.u32 %v176, 2147483648
    %v205 = vsel %vm203, %v204, %v202
    %v206 = vadd.f32 %v193, 1e-06
    %v207 = vadd.f32 %v205, 1e-06
    %v208 = vrcp.pop %v206
    %v209 = vmul.f32 %v206, %v208
    %v210 = vsub.f32 1.0, %v209
    %v211 = vmul.f32 %v208, %v210
    %v212 = vadd.f32 %v208, %v211
    %vm213 = vweird.f32 %v206
    %vm214 = vweird.f32 %v208
    %vm215 = vmor %vm213, %vm214
    %v216 = vsel %vm215, %v208, %v212
    %v217 = vand.u32 2147483647, %v206
    %vm218 = vcmp.eq.f32.partialorder %v217, 8.507059e+37
    %v219 = vand.u32 %v206, 2147483648
    %v220 = vor.u32 1.1754944e-38, %v219
    %v221 = vsel %vm218, %v220, %v216
    %v222 = vmul.f32 %v180, %v221
    %v223 = vrcp.pop %v207
    %v224 = vmul.f32 %v207, %v223
    %v225 = vsub.f32 1.0, %v224
    %v226 = vmul.f32 %v223, %v225
    %v227 = vadd.f32 %v223, %v226
    %vm228 = vweird.f32 %v207
    %vm229 = vweird.f32 %v223
    %vm230 = vmor %vm228, %vm229
    %v231 = vsel %vm230, %v223, %v227
    %v232 = vand.u32 2147483647, %v207
    %vm233 = vcmp.eq.f32.partialorder %v232, 8.507059e+37
    %v234 = vand.u32 %v207, 2147483648
    %v235 = vor.u32 1.1754944e-38, %v234
    %v236 = vsel %vm233, %v235, %v231
    %v237 = vmul.f32 %v181, %v236
    %v239 = vperm.slane %v141, 0
    %v241 = vadd.f32 %v222, %v239
    %v242 = vadd.f32 %v237, %v239
    %v243 = vld [vmem:[%s4] sm:$0xff]
    %v244 = vld [vmem:[%s4 + $0x8] sm:$0xff]
    %v245 = vld [vmem:[%s4 + $0x10] sm:$0xff]
    %v246 = vld [vmem:[%s4 + $0x18] sm:$0xff]
    %v247 = vld [vmem:[#allocation8] sm:$0x1]
    %v249 = vperm.slane %v247, 0
    %v252 = vsel %vm142, %v241, 0
    %v255 = vsel %vm142, %v242, 0
    %257 = vmatpush.msra.mxu0 0.0
    %258 = vmatpush.msra.mxu0 0.0
    %259 = vmatpush.msra.mxu0 0.0
    %260 = vmatpush.msra.mxu0 0.0
    %261 = vmatpush.msra.mxu0 0.0
    %262 = vmatpush.msra.mxu0 0.0
    %263 = vmatpush.msra.mxu0 0.0
    %264 = vmatpush.msra.mxu0 0.0
    %265 = vmatpush.msra.mxu0 0.0
    %266 = vmatpush.msra.mxu0 0.0
    %267 = vmatpush.msra.mxu0 0.0
    %268 = vmatpush.msra.mxu0 0.0
    %269 = vmatpush.msra.mxu0 %v246
    %270 = vmatpush.msra.mxu0 %v245
    %271 = vmatpush.msra.mxu0 %v244
    %272 = vmatpush.msra.mxu0 %v243
    %273 = vmatmul.f32.gmra.mxu0 %v252
    %v274 = vpop.f32.mrf.mxu0
    %v275 = vadd.f32 %v249, %v274
    %276 = vmatmul.f32.gmra.mxu0 %v255
    %v277 = vpop.f32.mrf.mxu0
    %v278 = vadd.f32 %v249, %v277
    %279 = vdwg.mxu0
    %v282 = vperm.slane %v138, 0
    %v283 = vperm.slane %v139, 0
    %287 = vrot.lane.b32.xlu0 %v275, 96
    %v288 = vpop.permute.xlu0 %287
    %vm289 = vcmask 64512
    %v290 = vsel %vm289, %v275, 0
    %v292 = vsel %vm289, %v288, 0
    %294 = vmatpush.xpose.msra.mxu0 0.0
    %295 = vmatpush.xpose.msra.mxu0 0.0
    %296 = vmatpush.xpose.msra.mxu0 0.0
    %297 = vmatpush.xpose.msra.mxu0 0.0
    %298 = vmatpush.xpose.msra.mxu0 0.0
    %299 = vmatpush.xpose.msra.mxu0 0.0
    %300 = vmatpush.xpose.msra.mxu0 0.0
    %301 = vmatpush.xpose.msra.mxu0 0.0
    %302 = vmatpush.xpose.msra.mxu0 0.0
    %303 = vmatpush.xpose.msra.mxu0 0.0
    %304 = vmatpush.xpose.msra.mxu0 0.0
    %305 = vmatpush.xpose.msra.mxu0 0.0
    %306 = vmatpush.xpose.msra.mxu0 0.0
    %307 = vmatpush.xpose.msra.mxu0 0.0
    %308 = vmatpush.xpose.msra.mxu0 0.0
    %309 = vmatpush.xpose.msra.mxu0 %v292
    %310 = vmatmul.f32.gmra.mxu0 %v290
    %v311 = vpop.f32.mrf.mxu0
    %v312 = vadd.f32 %v282, %v311
    %313 = vdwg.mxu0
    %315 = vrot.lane.b32.xlu0 %v278, 96
    %v316 = vpop.permute.xlu0 %315
    %v317 = vsel %vm289, %v278, 0
    %v319 = vsel %vm289, %v316, 0
    %321 = vmatpush.xpose.msra.mxu0 0.0
    %322 = vmatpush.xpose.msra.mxu0 0.0
    %323 = vmatpush.xpose.msra.mxu0 0.0
    %324 = vmatpush.xpose.msra.mxu0 0.0
    %325 = vmatpush.xpose.msra.mxu0 0.0
    %326 = vmatpush.xpose.msra.mxu0 0.0
    %327 = vmatpush.xpose.msra.mxu0 0.0
    %328 = vmatpush.xpose.msra.mxu0 0.0
    %329 = vmatpush.xpose.msra.mxu0 0.0
    %330 = vmatpush.xpose.msra.mxu0 0.0
    %331 = vmatpush.xpose.msra.mxu0 0.0
    %332 = vmatpush.xpose.msra.mxu0 0.0
    %333 = vmatpush.xpose.msra.mxu0 0.0
    %334 = vmatpush.xpose.msra.mxu0 0.0
    %335 = vmatpush.xpose.msra.mxu0 0.0
    %336 = vmatpush.xpose.msra.mxu0 %v319
    %337 = vmatmul.f32.gmra.mxu0 %v317
    %v338 = vpop.f32.mrf.mxu0
    %v339 = vadd.f32 %v283, %v338
    %340 = vdwg.mxu0
    %v341 = vsel %vm289, %v312, -inf
    %342 = vmax.xlane.f32.xlu0 %v341
    %v343 = vpop.xlane.xlu0 %342
    %v344 = vsel %vm289, %v339, -inf
    %345 = vmax.xlane.f32.xlu0 %v344
    %v346 = vpop.xlane.xlu0 %345
    %v347 = vsub.f32 %v312, %v343
    %v348 = vsub.f32 %v339, %v346
    %v349 = vmul.f32 %v347, 1.442695
    %v350 = vpow.pop %v349
    %v351 = vmul.f32 %v348, 1.442695
    %v352 = vpow.pop %v351
    %v353 = vsel %vm289, %v350, 0.0
    %354 = vadd.xlane.f32.xlu0 %v353
    %v355 = vpop.xlane.xlu0 %354
    %v356 = vsel %vm289, %v352, 0.0
    %357 = vadd.xlane.f32.xlu0 %v356
    %v358 = vpop.xlane.xlu0 %357
    %v359 = vrcp.pop %v355
    %v360 = vmul.f32 %v355, %v359
    %v361 = vsub.f32 1.0, %v360
    %v362 = vmul.f32 %v359, %v361
    %v363 = vadd.f32 %v359, %v362
    %vm364 = vweird.f32 %v355
    %vm365 = vweird.f32 %v359
    %vm366 = vmor %vm364, %vm365
    %v367 = vsel %vm366, %v359, %v363
    %v368 = vand.u32 2147483647, %v355
    %vm369 = vcmp.eq.f32.partialorder %v368, 8.507059e+37
    %v370 = vand.u32 %v355, 2147483648
    %v371 = vor.u32 1.1754944e-38, %v370
    %v372 = vsel %vm369, %v371, %v367
    %v373 = vmul.f32 %v350, %v372
    %v374 = vrcp.pop %v358
    %v375 = vmul.f32 %v358, %v374
    %v376 = vsub.f32 1.0, %v375
    %v377 = vmul.f32 %v374, %v376
    %v378 = vadd.f32 %v374, %v377
    %vm379 = vweird.f32 %v358
    %vm380 = vweird.f32 %v374
    %vm381 = vmor %vm379, %vm380
    %v382 = vsel %vm381, %v374, %v378
    %v383 = vand.u32 2147483647, %v358
    %vm384 = vcmp.eq.f32.partialorder %v383, 8.507059e+37
    %v385 = vand.u32 %v358, 2147483648
    %v386 = vor.u32 1.1754944e-38, %v385
    %v387 = vsel %vm384, %v386, %v382
    %v388 = vmul.f32 %v352, %v387
    %389 = vrot.lane.b32.xlu0 %v275, 64
    %v390 = vpop.permute.xlu0 %389
    %v393 = vsel %vm289, %v373, 0
    %395 = vmatpush.msra.mxu0 0.0
    %396 = vmatpush.msra.mxu0 0.0
    %397 = vmatpush.msra.mxu0 0.0
    %398 = vmatpush.msra.mxu0 0.0
    %399 = vmatpush.msra.mxu0 0.0
    %400 = vmatpush.msra.mxu0 0.0
    %401 = vmatpush.msra.mxu0 0.0
    %402 = vmatpush.msra.mxu0 0.0
    %403 = vmatpush.msra.mxu0 0.0
    %404 = vmatpush.msra.mxu0 0.0
    %405 = vmatpush.msra.mxu0 0.0
    %406 = vmatpush.msra.mxu0 0.0
    %407 = vmatpush.msra.mxu0 0.0
    %408 = vmatpush.msra.mxu0 0.0
    %409 = vmatpush.msra.mxu0 0.0
    %410 = vmatpush.msra.mxu0 %v390
    %411 = vmatmul.f32.gmra.mxu0 %v393
    %v412 = vpop.f32.mrf.mxu0
    %v413 = vadd.f32 0.0, %v412
    %414 = vdwg.mxu0
    %415 = vrot.lane.b32.xlu0 %v278, 64
    %v416 = vpop.permute.xlu0 %415
    %v419 = vsel %vm289, %v388, 0
    %421 = vmatpush.msra.mxu0 0.0
    %422 = vmatpush.msra.mxu0 0.0
    %423 = vmatpush.msra.mxu0 0.0
    %424 = vmatpush.msra.mxu0 0.0
    %425 = vmatpush.msra.mxu0 0.0
    %426 = vmatpush.msra.mxu0 0.0
    %427 = vmatpush.msra.mxu0 0.0
    %428 = vmatpush.msra.mxu0 0.0
    %429 = vmatpush.msra.mxu0 0.0
    %430 = vmatpush.msra.mxu0 0.0
    %431 = vmatpush.msra.mxu0 0.0
    %432 = vmatpush.msra.mxu0 0.0
    %433 = vmatpush.msra.mxu0 0.0
    %434 = vmatpush.msra.mxu0 0.0
    %435 = vmatpush.msra.mxu0 0.0
    %436 = vmatpush.msra.mxu0 %v416
    %437 = vmatmul.f32.gmra.mxu0 %v419
    %v438 = vpop.f32.mrf.mxu0
    %v439 = vadd.f32 0.0, %v438
    %440 = vdwg.mxu0
    %441 = vrot.lane.b32.xlu0 %v275, 120
    %v442 = vpop.permute.xlu0 %441
    %443 = vrot.lane.b32.xlu0 %v275, 88
    %v444 = vpop.permute.xlu0 %443
    %v445 = vsel %vm289, %v442, 0
    %v447 = vsel %vm289, %v444, 0
    %449 = vmatpush.xpose.msra.mxu0 0.0
    %450 = vmatpush.xpose.msra.mxu0 0.0
    %451 = vmatpush.xpose.msra.mxu0 0.0
    %452 = vmatpush.xpose.msra.mxu0 0.0
    %453 = vmatpush.xpose.msra.mxu0 0.0
    %454 = vmatpush.xpose.msra.mxu0 0.0
    %455 = vmatpush.xpose.msra.mxu0 0.0
    %456 = vmatpush.xpose.msra.mxu0 0.0
    %457 = vmatpush.xpose.msra.mxu0 0.0
    %458 = vmatpush.xpose.msra.mxu0 0.0
    %459 = vmatpush.xpose.msra.mxu0 0.0
    %460 = vmatpush.xpose.msra.mxu0 0.0
    %461 = vmatpush.xpose.msra.mxu0 0.0
    %462 = vmatpush.xpose.msra.mxu0 0.0
    %463 = vmatpush.xpose.msra.mxu0 0.0
    %464 = vmatpush.xpose.msra.mxu0 %v447
    %465 = vmatmul.f32.gmra.mxu0 %v445
    %v466 = vpop.f32.mrf.mxu0
    %v467 = vadd.f32 %v282, %v466
    %468 = vdwg.mxu0
    %469 = vrot.lane.b32.xlu0 %v278, 120
    %v470 = vpop.permute.xlu0 %469
    %471 = vrot.lane.b32.xlu0 %v278, 88
    %v472 = vpop.permute.xlu0 %471
    %v473 = vsel %vm289, %v470, 0
    %v475 = vsel %vm289, %v472, 0
    %477 = vmatpush.xpose.msra.mxu0 0.0
    %478 = vmatpush.xpose.msra.mxu0 0.0
    %479 = vmatpush.xpose.msra.mxu0 0.0
    %480 = vmatpush.xpose.msra.mxu0 0.0
    %481 = vmatpush.xpose.msra.mxu0 0.0
    %482 = vmatpush.xpose.msra.mxu0 0.0
    %483 = vmatpush.xpose.msra.mxu0 0.0
    %484 = vmatpush.xpose.msra.mxu0 0.0
    %485 = vmatpush.xpose.msra.mxu0 0.0
    %486 = vmatpush.xpose.msra.mxu0 0.0
    %487 = vmatpush.xpose.msra.mxu0 0.0
    %488 = vmatpush.xpose.msra.mxu0 0.0
    %489 = vmatpush.xpose.msra.mxu0 0.0
    %490 = vmatpush.xpose.msra.mxu0 0.0
    %491 = vmatpush.xpose.msra.mxu0 0.0
    %492 = vmatpush.xpose.msra.mxu0 %v475
    %493 = vmatmul.f32.gmra.mxu0 %v473
    %v494 = vpop.f32.mrf.mxu0
    %v495 = vadd.f32 %v283, %v494
    %496 = vdwg.mxu0
    %v497 = vsel %vm289, %v467, -inf
    %498 = vmax.xlane.f32.xlu0 %v497
    %v499 = vpop.xlane.xlu0 %498
    %v500 = vsel %vm289, %v495, -inf
    %501 = vmax.xlane.f32.xlu0 %v500
    %v502 = vpop.xlane.xlu0 %501
    %v503 = vsub.f32 %v467, %v499
    %v504 = vsub.f32 %v495, %v502
    %v505 = vmul.f32 %v503, 1.442695
    %v506 = vpow.pop %v505
    %v507 = vmul.f32 %v504, 1.442695
    %v508 = vpow.pop %v507
    %v509 = vsel %vm289, %v506, 0.0
    %510 = vadd.xlane.f32.xlu0 %v509
    %v511 = vpop.xlane.xlu0 %510
    %v512 = vsel %vm289, %v508, 0.0
    %513 = vadd.xlane.f32.xlu0 %v512
    %v514 = vpop.xlane.xlu0 %513
    %v515 = vrcp.pop %v511
    %v516 = vmul.f32 %v511, %v515
    %v517 = vsub.f32 1.0, %v516
    %v518 = vmul.f32 %v515, %v517
    %v519 = vadd.f32 %v515, %v518
    %vm520 = vweird.f32 %v511
    %vm521 = vweird.f32 %v515
    %vm522 = vmor %vm520, %vm521
    %v523 = vsel %vm522, %v515, %v519
    %v524 = vand.u32 2147483647, %v511
    %vm525 = vcmp.eq.f32.partialorder %v524, 8.507059e+37
    %v526 = vand.u32 %v511, 2147483648
    %v527 = vor.u32 1.1754944e-38, %v526
    %v528 = vsel %vm525, %v527, %v523
    %v529 = vmul.f32 %v506, %v528
    %v530 = vrcp.pop %v514
    %v531 = vmul.f32 %v514, %v530
    %v532 = vsub.f32 1.0, %v531
    %v533 = vmul.f32 %v530, %v532
    %v534 = vadd.f32 %v530, %v533
    %vm535 = vweird.f32 %v514
    %vm536 = vweird.f32 %v530
    %vm537 = vmor %vm535, %vm536
    %v538 = vsel %vm537, %v530, %v534
    %v539 = vand.u32 2147483647, %v514
    %vm540 = vcmp.eq.f32.partialorder %v539, 8.507059e+37
    %v541 = vand.u32 %v514, 2147483648
    %v542 = vor.u32 1.1754944e-38, %v541
    %v543 = vsel %vm540, %v542, %v538
    %v544 = vmul.f32 %v508, %v543
    %545 = vrot.lane.b32.xlu0 %v275, 56
    %v546 = vpop.permute.xlu0 %545
    %v549 = vsel %vm289, %v529, 0
    %551 = vmatpush.msra.mxu0 0.0
    %552 = vmatpush.msra.mxu0 0.0
    %553 = vmatpush.msra.mxu0 0.0
    %554 = vmatpush.msra.mxu0 0.0
    %555 = vmatpush.msra.mxu0 0.0
    %556 = vmatpush.msra.mxu0 0.0
    %557 = vmatpush.msra.mxu0 0.0
    %558 = vmatpush.msra.mxu0 0.0
    %559 = vmatpush.msra.mxu0 0.0
    %560 = vmatpush.msra.mxu0 0.0
    %561 = vmatpush.msra.mxu0 0.0
    %562 = vmatpush.msra.mxu0 0.0
    %563 = vmatpush.msra.mxu0 0.0
    %564 = vmatpush.msra.mxu0 0.0
    %565 = vmatpush.msra.mxu0 0.0
    %566 = vmatpush.msra.mxu0 %v546
    %567 = vmatmul.f32.gmra.mxu0 %v549
    %v568 = vpop.f32.mrf.mxu0
    %v569 = vadd.f32 0.0, %v568
    %570 = vdwg.mxu0
    %571 = vrot.lane.b32.xlu0 %v278, 56
    %v572 = vpop.permute.xlu0 %571
    %v575 = vsel %vm289, %v544, 0
    %577 = vmatpush.msra.mxu0 0.0
    %578 = vmatpush.msra.mxu0 0.0
    %579 = vmatpush.msra.mxu0 0.0
    %580 = vmatpush.msra.mxu0 0.0
    %581 = vmatpush.msra.mxu0 0.0
    %582 = vmatpush.msra.mxu0 0.0
    %583 = vmatpush.msra.mxu0 0.0
    %584 = vmatpush.msra.mxu0 0.0
    %585 = vmatpush.msra.mxu0 0.0
    %586 = vmatpush.msra.mxu0 0.0
    %587 = vmatpush.msra.mxu0 0.0
    %588 = vmatpush.msra.mxu0 0.0
    %589 = vmatpush.msra.mxu0 0.0
    %590 = vmatpush.msra.mxu0 0.0
    %591 = vmatpush.msra.mxu0 0.0
    %592 = vmatpush.msra.mxu0 %v572
    %593 = vmatmul.f32.gmra.mxu0 %v575
    %v594 = vpop.f32.mrf.mxu0
    %v595 = vadd.f32 0.0, %v594
    %596 = vdwg.mxu0
    %597 = vrot.lane.b32.xlu0 %v275, 112
    %v598 = vpop.permute.xlu0 %597
    %599 = vrot.lane.b32.xlu0 %v275, 80
    %v600 = vpop.permute.xlu0 %599
    %v601 = vsel %vm289, %v598, 0
    %v603 = vsel %vm289, %v600, 0
    %605 = vmatpush.xpose.msra.mxu0 0.0
    %606 = vmatpush.xpose.msra.mxu0 0.0
    %607 = vmatpush.xpose.msra.mxu0 0.0
    %608 = vmatpush.xpose.msra.mxu0 0.0
    %609 = vmatpush.xpose.msra.mxu0 0.0
    %610 = vmatpush.xpose.msra.mxu0 0.0
    %611 = vmatpush.xpose.msra.mxu0 0.0
    %612 = vmatpush.xpose.msra.mxu0 0.0
    %613 = vmatpush.xpose.msra.mxu0 0.0
    %614 = vmatpush.xpose.msra.mxu0 0.0
    %615 = vmatpush.xpose.msra.mxu0 0.0
    %616 = vmatpush.xpose.msra.mxu0 0.0
    %617 = vmatpush.xpose.msra.mxu0 0.0
    %618 = vmatpush.xpose.msra.mxu0 0.0
    %619 = vmatpush.xpose.msra.mxu0 0.0
    %620 = vmatpush.xpose.msra.mxu0 %v603
    %621 = vmatmul.f32.gmra.mxu0 %v601
    %v622 = vpop.f32.mrf.mxu0
    %v623 = vadd.f32 %v282, %v622
    %624 = vdwg.mxu0
    %625 = vrot.lane.b32.xlu0 %v278, 112
    %v626 = vpop.permute.xlu0 %625
    %627 = vrot.lane.b32.xlu0 %v278, 80
    %v628 = vpop.permute.xlu0 %627
    %v629 = vsel %vm289, %v626, 0
    %v631 = vsel %vm289, %v628, 0
    %633 = vmatpush.xpose.msra.mxu0 0.0
    %634 = vmatpush.xpose.msra.mxu0 0.0
    %635 = vmatpush.xpose.msra.mxu0 0.0
    %636 = vmatpush.xpose.msra.mxu0 0.0
    %637 = vmatpush.xpose.msra.mxu0 0.0
    %638 = vmatpush.xpose.msra.mxu0 0.0
    %639 = vmatpush.xpose.msra.mxu0 0.0
    %640 = vmatpush.xpose.msra.mxu0 0.0
    %641 = vmatpush.xpose.msra.mxu0 0.0
    %642 = vmatpush.xpose.msra.mxu0 0.0
    %643 = vmatpush.xpose.msra.mxu0 0.0
    %644 = vmatpush.xpose.msra.mxu0 0.0
    %645 = vmatpush.xpose.msra.mxu0 0.0
    %646 = vmatpush.xpose.msra.mxu0 0.0
    %647 = vmatpush.xpose.msra.mxu0 0.0
    %648 = vmatpush.xpose.msra.mxu0 %v631
    %649 = vmatmul.f32.gmra.mxu0 %v629
    %v650 = vpop.f32.mrf.mxu0
    %v651 = vadd.f32 %v283, %v650
    %652 = vdwg.mxu0
    %v653 = vsel %vm289, %v623, -inf
    %654 = vmax.xlane.f32.xlu0 %v653
    %v655 = vpop.xlane.xlu0 %654
    %v656 = vsel %vm289, %v651, -inf
    %657 = vmax.xlane.f32.xlu0 %v656
    %v658 = vpop.xlane.xlu0 %657
    %v659 = vsub.f32 %v623, %v655
    %v660 = vsub.f32 %v651, %v658
    %v661 = vmul.f32 %v659, 1.442695
    %v662 = vpow.pop %v661
    %v663 = vmul.f32 %v660, 1.442695
    %v664 = vpow.pop %v663
    %v665 = vsel %vm289, %v662, 0.0
    %666 = vadd.xlane.f32.xlu0 %v665
    %v667 = vpop.xlane.xlu0 %666
    %v668 = vsel %vm289, %v664, 0.0
    %669 = vadd.xlane.f32.xlu0 %v668
    %v670 = vpop.xlane.xlu0 %669
    %v671 = vrcp.pop %v667
    %v672 = vmul.f32 %v667, %v671
    %v673 = vsub.f32 1.0, %v672
    %v674 = vmul.f32 %v671, %v673
    %v675 = vadd.f32 %v671, %v674
    %vm676 = vweird.f32 %v667
    %vm677 = vweird.f32 %v671
    %vm678 = vmor %vm676, %vm677
    %v679 = vsel %vm678, %v671, %v675
    %v680 = vand.u32 2147483647, %v667
    %vm681 = vcmp.eq.f32.partialorder %v680, 8.507059e+37
    %v682 = vand.u32 %v667, 2147483648
    %v683 = vor.u32 1.1754944e-38, %v682
    %v684 = vsel %vm681, %v683, %v679
    %v685 = vmul.f32 %v662, %v684
    %v686 = vrcp.pop %v670
    %v687 = vmul.f32 %v670, %v686
    %v688 = vsub.f32 1.0, %v687
    %v689 = vmul.f32 %v686, %v688
    %v690 = vadd.f32 %v686, %v689
    %vm691 = vweird.f32 %v670
    %vm692 = vweird.f32 %v686
    %vm693 = vmor %vm691, %vm692
    %v694 = vsel %vm693, %v686, %v690
    %v695 = vand.u32 2147483647, %v670
    %vm696 = vcmp.eq.f32.partialorder %v695, 8.507059e+37
    %v697 = vand.u32 %v670, 2147483648
    %v698 = vor.u32 1.1754944e-38, %v697
    %v699 = vsel %vm696, %v698, %v694
    %v700 = vmul.f32 %v664, %v699
    %701 = vrot.lane.b32.xlu0 %v275, 48
    %v702 = vpop.permute.xlu0 %701
    %v705 = vsel %vm289, %v685, 0
    %707 = vmatpush.msra.mxu0 0.0
    %708 = vmatpush.msra.mxu0 0.0
    %709 = vmatpush.msra.mxu0 0.0
    %710 = vmatpush.msra.mxu0 0.0
    %711 = vmatpush.msra.mxu0 0.0
    %712 = vmatpush.msra.mxu0 0.0
    %713 = vmatpush.msra.mxu0 0.0
    %714 = vmatpush.msra.mxu0 0.0
    %715 = vmatpush.msra.mxu0 0.0
    %716 = vmatpush.msra.mxu0 0.0
    %717 = vmatpush.msra.mxu0 0.0
    %718 = vmatpush.msra.mxu0 0.0
    %719 = vmatpush.msra.mxu0 0.0
    %720 = vmatpush.msra.mxu0 0.0
    %721 = vmatpush.msra.mxu0 0.0
    %722 = vmatpush.msra.mxu0 %v702
    %723 = vmatmul.f32.gmra.mxu0 %v705
    %v724 = vpop.f32.mrf.mxu0
    %v725 = vadd.f32 0.0, %v724
    %726 = vdwg.mxu0
    %727 = vrot.lane.b32.xlu0 %v278, 48
    %v728 = vpop.permute.xlu0 %727
    %v731 = vsel %vm289, %v700, 0
    %733 = vmatpush.msra.mxu0 0.0
    %734 = vmatpush.msra.mxu0 0.0
    %735 = vmatpush.msra.mxu0 0.0
    %736 = vmatpush.msra.mxu0 0.0
    %737 = vmatpush.msra.mxu0 0.0
    %738 = vmatpush.msra.mxu0 0.0
    %739 = vmatpush.msra.mxu0 0.0
    %740 = vmatpush.msra.mxu0 0.0
    %741 = vmatpush.msra.mxu0 0.0
    %742 = vmatpush.msra.mxu0 0.0
    %743 = vmatpush.msra.mxu0 0.0
    %744 = vmatpush.msra.mxu0 0.0
    %745 = vmatpush.msra.mxu0 0.0
    %746 = vmatpush.msra.mxu0 0.0
    %747 = vmatpush.msra.mxu0 0.0
    %748 = vmatpush.msra.mxu0 %v728
    %749 = vmatmul.f32.gmra.mxu0 %v731
    %v750 = vpop.f32.mrf.mxu0
    %v751 = vadd.f32 0.0, %v750
    %752 = vdwg.mxu0
    %753 = vrot.lane.b32.xlu0 %v275, 104
    %v754 = vpop.permute.xlu0 %753
    %755 = vrot.lane.b32.xlu0 %v275, 72
    %v756 = vpop.permute.xlu0 %755
    %v757 = vsel %vm289, %v754, 0
    %v759 = vsel %vm289, %v756, 0
    %761 = vmatpush.xpose.msra.mxu0 0.0
    %762 = vmatpush.xpose.msra.mxu0 0.0
    %763 = vmatpush.xpose.msra.mxu0 0.0
    %764 = vmatpush.xpose.msra.mxu0 0.0
    %765 = vmatpush.xpose.msra.mxu0 0.0
    %766 = vmatpush.xpose.msra.mxu0 0.0
    %767 = vmatpush.xpose.msra.mxu0 0.0
    %768 = vmatpush.xpose.msra.mxu0 0.0
    %769 = vmatpush.xpose.msra.mxu0 0.0
    %770 = vmatpush.xpose.msra.mxu0 0.0
    %771 = vmatpush.xpose.msra.mxu0 0.0
    %772 = vmatpush.xpose.msra.mxu0 0.0
    %773 = vmatpush.xpose.msra.mxu0 0.0
    %774 = vmatpush.xpose.msra.mxu0 0.0
    %775 = vmatpush.xpose.msra.mxu0 0.0
    %776 = vmatpush.xpose.msra.mxu0 %v759
    %777 = vmatmul.f32.gmra.mxu0 %v757
    %v778 = vpop.f32.mrf.mxu0
    %v779 = vadd.f32 %v282, %v778
    %780 = vdwg.mxu0
    %781 = vrot.lane.b32.xlu0 %v278, 104
    %v782 = vpop.permute.xlu0 %781
    %783 = vrot.lane.b32.xlu0 %v278, 72
    %v784 = vpop.permute.xlu0 %783
    %v785 = vsel %vm289, %v782, 0
    %v787 = vsel %vm289, %v784, 0
    %789 = vmatpush.xpose.msra.mxu0 0.0
    %790 = vmatpush.xpose.msra.mxu0 0.0
    %791 = vmatpush.xpose.msra.mxu0 0.0
    %792 = vmatpush.xpose.msra.mxu0 0.0
    %793 = vmatpush.xpose.msra.mxu0 0.0
    %794 = vmatpush.xpose.msra.mxu0 0.0
    %795 = vmatpush.xpose.msra.mxu0 0.0
    %796 = vmatpush.xpose.msra.mxu0 0.0
    %797 = vmatpush.xpose.msra.mxu0 0.0
    %798 = vmatpush.xpose.msra.mxu0 0.0
    %799 = vmatpush.xpose.msra.mxu0 0.0
    %800 = vmatpush.xpose.msra.mxu0 0.0
    %801 = vmatpush.xpose.msra.mxu0 0.0
    %802 = vmatpush.xpose.msra.mxu0 0.0
    %803 = vmatpush.xpose.msra.mxu0 0.0
    %804 = vmatpush.xpose.msra.mxu0 %v787
    %805 = vmatmul.f32.gmra.mxu0 %v785
    %v806 = vpop.f32.mrf.mxu0
    %v807 = vadd.f32 %v283, %v806
    %808 = vdwg.mxu0
    %v809 = vsel %vm289, %v779, -inf
    %810 = vmax.xlane.f32.xlu0 %v809
    %v811 = vpop.xlane.xlu0 %810
    %v812 = vsel %vm289, %v807, -inf
    %813 = vmax.xlane.f32.xlu0 %v812
    %v814 = vpop.xlane.xlu0 %813
    %v815 = vsub.f32 %v779, %v811
    %v816 = vsub.f32 %v807, %v814
    %v817 = vmul.f32 %v815, 1.442695
    %v818 = vpow.pop %v817
    %v819 = vmul.f32 %v816, 1.442695
    %v820 = vpow.pop %v819
    %v821 = vsel %vm289, %v818, 0.0
    %822 = vadd.xlane.f32.xlu0 %v821
    %v823 = vpop.xlane.xlu0 %822
    %v824 = vsel %vm289, %v820, 0.0
    %825 = vadd.xlane.f32.xlu0 %v824
    %v826 = vpop.xlane.xlu0 %825
    %v827 = vrcp.pop %v823
    %v828 = vmul.f32 %v823, %v827
    %v829 = vsub.f32 1.0, %v828
    %v830 = vmul.f32 %v827, %v829
    %v831 = vadd.f32 %v827, %v830
    %vm832 = vweird.f32 %v823
    %vm833 = vweird.f32 %v827
    %vm834 = vmor %vm832, %vm833
    %v835 = vsel %vm834, %v827, %v831
    %v836 = vand.u32 2147483647, %v823
    %vm837 = vcmp.eq.f32.partialorder %v836, 8.507059e+37
    %v838 = vand.u32 %v823, 2147483648
    %v839 = vor.u32 1.1754944e-38, %v838
    %v840 = vsel %vm837, %v839, %v835
    %v841 = vmul.f32 %v818, %v840
    %v842 = vrcp.pop %v826
    %v843 = vmul.f32 %v826, %v842
    %v844 = vsub.f32 1.0, %v843
    %v845 = vmul.f32 %v842, %v844
    %v846 = vadd.f32 %v842, %v845
    %vm847 = vweird.f32 %v826
    %vm848 = vweird.f32 %v842
    %vm849 = vmor %vm847, %vm848
    %v850 = vsel %vm849, %v842, %v846
    %v851 = vand.u32 2147483647, %v826
    %vm852 = vcmp.eq.f32.partialorder %v851, 8.507059e+37
    %v853 = vand.u32 %v826, 2147483648
    %v854 = vor.u32 1.1754944e-38, %v853
    %v855 = vsel %vm852, %v854, %v850
    %v856 = vmul.f32 %v820, %v855
    %857 = vrot.lane.b32.xlu0 %v275, 40
    %v858 = vpop.permute.xlu0 %857
    %v861 = vsel %vm289, %v841, 0
    %863 = vmatpush.msra.mxu0 0.0
    %864 = vmatpush.msra.mxu0 0.0
    %865 = vmatpush.msra.mxu0 0.0
    %866 = vmatpush.msra.mxu0 0.0
    %867 = vmatpush.msra.mxu0 0.0
    %868 = vmatpush.msra.mxu0 0.0
    %869 = vmatpush.msra.mxu0 0.0
    %870 = vmatpush.msra.mxu0 0.0
    %871 = vmatpush.msra.mxu0 0.0
    %872 = vmatpush.msra.mxu0 0.0
    %873 = vmatpush.msra.mxu0 0.0
    %874 = vmatpush.msra.mxu0 0.0
    %875 = vmatpush.msra.mxu0 0.0
    %876 = vmatpush.msra.mxu0 0.0
    %877 = vmatpush.msra.mxu0 0.0
    %878 = vmatpush.msra.mxu0 %v858
    %879 = vmatmul.f32.gmra.mxu0 %v861
    %v880 = vpop.f32.mrf.mxu0
    %v881 = vadd.f32 0.0, %v880
    %882 = vdwg.mxu0
    %883 = vrot.lane.b32.xlu0 %v278, 40
    %v884 = vpop.permute.xlu0 %883
    %v887 = vsel %vm289, %v856, 0
    %889 = vmatpush.msra.mxu0 0.0
    %890 = vmatpush.msra.mxu0 0.0
    %891 = vmatpush.msra.mxu0 0.0
    %892 = vmatpush.msra.mxu0 0.0
    %893 = vmatpush.msra.mxu0 0.0
    %894 = vmatpush.msra.mxu0 0.0
    %895 = vmatpush.msra.mxu0 0.0
    %896 = vmatpush.msra.mxu0 0.0
    %897 = vmatpush.msra.mxu0 0.0
    %898 = vmatpush.msra.mxu0 0.0
    %899 = vmatpush.msra.mxu0 0.0
    %900 = vmatpush.msra.mxu0 0.0
    %901 = vmatpush.msra.mxu0 0.0
    %902 = vmatpush.msra.mxu0 0.0
    %903 = vmatpush.msra.mxu0 0.0
    %904 = vmatpush.msra.mxu0 %v884
    %905 = vmatmul.f32.gmra.mxu0 %v887
    %v906 = vpop.f32.mrf.mxu0
    %v907 = vadd.f32 0.0, %v906
    %908 = vdwg.mxu0
    %911 = vrot.lane.b32.xlu0 %v569, 8
    %v912 = vpop.permute.xlu0 %911
    %913 = vrot.lane.b32.xlu0 %v595, 8
    %v914 = vpop.permute.xlu0 %913
    %919 = vrot.lane.b32.xlu0 %v725, 16
    %v920 = vpop.permute.xlu0 %919
    %921 = vrot.lane.b32.xlu0 %v751, 16
    %v922 = vpop.permute.xlu0 %921
    %927 = vrot.lane.b32.xlu0 %v881, 24
    %v928 = vpop.permute.xlu0 %927
    %929 = vrot.lane.b32.xlu0 %v907, 24
    %v930 = vpop.permute.xlu0 %929
    %v933 = vsel %vm289, %v413, %v912
    %v934 = vsel %vm289, %v439, %v914
    %vm935 = vcmask 130048
    %v936 = vsel %vm935, %v933, %v920
    %v937 = vsel %vm935, %v934, %v922
    %vm938 = vcmask 195584
    %v939 = vsel %vm938, %v936, %v928
    %v940 = vsel %vm938, %v937, %v930
    %v941 = vld [vmem:[%s6] sm:$0xff]
    %v942 = vld [vmem:[%s6 + $0x8] sm:$0xff]
    %v943 = vld [vmem:[%s6 + $0x10] sm:$0xff]
    %v944 = vld [vmem:[%s6 + $0x18] sm:$0xff]
    %v945 = vld [vmem:[%s7] sm:$0x1]
    %v947 = vperm.slane %v945, 0
    %v950 = vsel %vm142, %v939, 0
    %v953 = vsel %vm142, %v940, 0
    %955 = vmatpush.msra.mxu0 0.0
    %956 = vmatpush.msra.mxu0 0.0
    %957 = vmatpush.msra.mxu0 0.0
    %958 = vmatpush.msra.mxu0 0.0
    %959 = vmatpush.msra.mxu0 0.0
    %960 = vmatpush.msra.mxu0 0.0
    %961 = vmatpush.msra.mxu0 0.0
    %962 = vmatpush.msra.mxu0 0.0
    %963 = vmatpush.msra.mxu0 0.0
    %964 = vmatpush.msra.mxu0 0.0
    %965 = vmatpush.msra.mxu0 0.0
    %966 = vmatpush.msra.mxu0 0.0
    %967 = vmatpush.msra.mxu0 %v944
    %968 = vmatpush.msra.mxu0 %v943
    %969 = vmatpush.msra.mxu0 %v942
    %970 = vmatpush.msra.mxu0 %v941
    %971 = vmatmul.f32.gmra.mxu0 %v950
    %v972 = vpop.f32.mrf.mxu0
    %v973 = vadd.f32 %v947, %v972
    %974 = vmatmul.f32.gmra.mxu0 %v953
    %v975 = vpop.f32.mrf.mxu0
    %v976 = vadd.f32 %v947, %v975
    %977 = vdwg.mxu0
    %v978 = vadd.f32 %v132, %v973
    %v979 = vadd.f32 %v133, %v976
    %v980 = vld [vmem:[#allocation10] sm:$0x1]
    %v981 = vld [vmem:[%s9] sm:$0x1]
    %v982 = vsel %vm142, %v978, 0.0
    %983 = vadd.xlane.f32.xlu0 %v982
    %v984 = vpop.xlane.xlu0 %983
    %v985 = vsel %vm142, %v979, 0.0
    %986 = vadd.xlane.f32.xlu0 %v985
    %v987 = vpop.xlane.xlu0 %986
    %v988 = vmul.f32 %v984, %v155
    %v989 = vmul.f32 %v987, %v155
    %v990 = vsub.f32 %v978, %v988
    %v991 = vsub.f32 %v979, %v989
    %v992 = vmul.f32 %v990, %v990
    %v993 = vmul.f32 %v991, %v991
    %v994 = vsel %vm142, %v992, 0.0
    %995 = vadd.xlane.f32.xlu0 %v994
    %v996 = vpop.xlane.xlu0 %995
    %v997 = vsel %vm142, %v993, 0.0
    %998 = vadd.xlane.f32.xlu0 %v997
    %v999 = vpop.xlane.xlu0 %998
    %v1000 = vmul.f32 %v996, %v174
    %v1001 = vmul.f32 %v999, %v174
    %v1003 = vperm.slane %v980, 0
    %v1005 = vmul.f32 %v1003, %v990
    %v1006 = vmul.f32 %v1003, %v991
    %v1007 = vrsqrt.pop %v1000
    %v1008 = vmul.f32 %v1007, %v1000
    %v1009 = vmul.f32 %v1008, %v1007
    %v1010 = vmul.f32 0.5, %v1009
    %v1011 = vsub.f32 1.5, %v1010
    %v1012 = vmul.f32 %v1007, %v1011
    %v1013 = vmul.f32 %v1000, %v1012
    %vm1014 = vcmp.eq.f32.partialorder %v1000, inf
    %v1015 = vsel %vm1014, %v1000, %v1013
    %vm1016 = vcmp.eq.f32.partialorder %v1000, 0.0
    %v1017 = vand.u32 %v1000, 2147483648
    %v1018 = vsel %vm1016, %v1017, %v1015
    %v1019 = vrsqrt.pop %v1001
    %v1020 = vmul.f32 %v1019, %v1001
    %v1021 = vmul.f32 %v1020, %v1019
    %v1022 = vmul.f32 0.5, %v1021
    %v1023 = vsub.f32 1.5, %v1022
    %v1024 = vmul.f32 %v1019, %v1023
    %v1025 = vmul.f32 %v1001, %v1024
    %vm1026 = vcmp.eq.f32.partialorder %v1001, inf
    %v1027 = vsel %vm1026, %v1001, %v1025
    %vm1028 = vcmp.eq.f32.partialorder %v1001, 0.0
    %v1029 = vand.u32 %v1001, 2147483648
    %v1030 = vsel %vm1028, %v1029, %v1027
    %v1031 = vadd.f32 %v1018, 1e-06
    %v1032 = vadd.f32 %v1030, 1e-06
    %v1033 = vrcp.pop %v1031
    %v1034 = vmul.f32 %v1031, %v1033
    %v1035 = vsub.f32 1.0, %v1034
    %v1036 = vmul.f32 %v1033, %v1035
    %v1037 = vadd.f32 %v1033, %v1036
    %vm1038 = vweird.f32 %v1031
    %vm1039 = vweird.f32 %v1033
    %vm1040 = vmor %vm1038, %vm1039
    %v1041 = vsel %vm1040, %v1033, %v1037
    %v1042 = vand.u32 2147483647, %v1031
    %vm1043 = vcmp.eq.f32.partialorder %v1042, 8.507059e+37
    %v1044 = vand.u32 %v1031, 2147483648
    %v1045 = vor.u32 1.1754944e-38, %v1044
    %v1046 = vsel %vm1043, %v1045, %v1041
    %v1047 = vmul.f32 %v1005, %v1046
    %v1048 = vrcp.pop %v1032
    %v1049 = vmul.f32 %v1032, %v1048
    %v1050 = vsub.f32 1.0, %v1049
    %v1051 = vmul.f32 %v1048, %v1050
    %v1052 = vadd.f32 %v1048, %v1051
    %vm1053 = vweird.f32 %v1032
    %vm1054 = vweird.f32 %v1048
    %vm1055 = vmor %vm1053, %vm1054
    %v1056 = vsel %vm1055, %v1048, %v1052
    %v1057 = vand.u32 2147483647, %v1032
    %vm1058 = vcmp.eq.f32.partialorder %v1057, 8.507059e+37
    %v1059 = vand.u32 %v1032, 2147483648
    %v1060 = vor.u32 1.1754944e-38, %v1059
    %v1061 = vsel %vm1058, %v1060, %v1056
    %v1062 = vmul.f32 %v1006, %v1061
    %v1064 = vperm.slane %v981, 0
    %v1066 = vadd.f32 %v1047, %v1064
    %v1067 = vadd.f32 %v1062, %v1064
    %v1068 = vld [vmem:[%s10] sm:$0xff]
    %v1069 = vld [vmem:[%s10 + $0x8] sm:$0xff]
    %v1070 = vld [vmem:[%s10 + $0x10] sm:$0xff]
    %v1071 = vld [vmem:[%s10 + $0x18] sm:$0xff]
    %v1072 = vld [vmem:[%s11] sm:$0x1]
    %v1074 = vperm.slane %v1072, 0
    %v1077 = vsel %vm142, %v1066, 0
    %v1080 = vsel %vm142, %v1067, 0
    %1082 = vmatpush.msra.mxu0 0.0
    %1083 = vmatpush.msra.mxu0 0.0
    %1084 = vmatpush.msra.mxu0 0.0
    %1085 = vmatpush.msra.mxu0 0.0
    %1086 = vmatpush.msra.mxu0 0.0
    %1087 = vmatpush.msra.mxu0 0.0
    %1088 = vmatpush.msra.mxu0 0.0
    %1089 = vmatpush.msra.mxu0 0.0
    %1090 = vmatpush.msra.mxu0 0.0
    %1091 = vmatpush.msra.mxu0 0.0
    %1092 = vmatpush.msra.mxu0 0.0
    %1093 = vmatpush.msra.mxu0 0.0
    %1094 = vmatpush.msra.mxu0 %v1071
    %1095 = vmatpush.msra.mxu0 %v1070
    %1096 = vmatpush.msra.mxu0 %v1069
    %1097 = vmatpush.msra.mxu0 %v1068
    %1098 = vmatmul.f32.gmra.mxu0 %v1077
    %v1099 = vpop.f32.mrf.mxu0
    %v1100 = vadd.f32 %v1074, %v1099
    %1101 = vmatmul.f32.gmra.mxu0 %v1080
    %v1102 = vpop.f32.mrf.mxu0
    %v1103 = vadd.f32 %v1074, %v1102
    %1104 = vdwg.mxu0
    %v1105 = vmax.f32 %v1100, 0.0
    %v1106 = vmax.f32 %v1103, 0.0
    %v1107 = vld [vmem:[%s12] sm:$0xff]
    %v1108 = vld [vmem:[%s12 + $0x8] sm:$0xff]
    %v1109 = vld [vmem:[%s12 + $0x10] sm:$0xff]
    %v1110 = vld [vmem:[%s12 + $0x18] sm:$0xff]
    %v1111 = vld [vmem:[%s12 + $0x20] sm:$0xff]
    %v1112 = vld [vmem:[%s12 + $0x28] sm:$0xff]
    %v1113 = vld [vmem:[%s12 + $0x30] sm:$0xff]
    %v1114 = vld [vmem:[%s12 + $0x38] sm:$0xff]
    %v1115 = vld [vmem:[%s13] sm:$0x1]
    %v1117 = vperm.slane %v1115, 0
    %vm1119 = vcmask 523264
    %v1121 = vsel %vm1119, %v1105, 0
    %v1124 = vsel %vm1119, %v1106, 0
    %1126 = vmatpush.msra.mxu0 0.0
    %1127 = vmatpush.msra.mxu0 0.0
    %1128 = vmatpush.msra.mxu0 0.0
    %1129 = vmatpush.msra.mxu0 0.0
    %1130 = vmatpush.msra.mxu0 0.0
    %1131 = vmatpush.msra.mxu0 0.0
    %1132 = vmatpush.msra.mxu0 0.0
    %1133 = vmatpush.msra.mxu0 0.0
    %1134 = vmatpush.msra.mxu0 %v1114
    %1135 = vmatpush.msra.mxu0 %v1113
    %1136 = vmatpush.msra.mxu0 %v1112
    %1137 = vmatpush.msra.mxu0 %v1111
    %1138 = vmatpush.msra.mxu0 %v1110
    %1139 = vmatpush.msra.mxu0 %v1109
    %1140 = vmatpush.msra.mxu0 %v1108
    %1141 = vmatpush.msra.mxu0 %v1107
    %1142 = vmatmul.f32.gmra.mxu0 %v1121
    %v1143 = vpop.f32.mrf.mxu0
    %v1144 = vadd.f32 %v1117, %v1143
    %1145 = vmatmul.f32.gmra.mxu0 %v1124
    %v1146 = vpop.f32.mrf.mxu0
    %v1147 = vadd.f32 %v1117, %v1146
    %1148 = vdwg.mxu0
    %v1149 = vadd.f32 %v978, %v1144
    %v1150 = vadd.f32 %v979, %v1147
    %s1151 = scalar_lea.vmem [#allocation7], 1
    %v1152 = vld [vmem:[%s1151] sm:$0x1]
    %s1153 = scalar_lea.vmem %s3, 1
    %v1154 = vld [vmem:[%s1153] sm:$0x1]
    %v1155 = vsel %vm142, %v1149, 0.0
    %1156 = vadd.xlane.f32.xlu0 %v1155
    %v1157 = vpop.xlane.xlu0 %1156
    %v1158 = vsel %vm142, %v1150, 0.0
    %1159 = vadd.xlane.f32.xlu0 %v1158
    %v1160 = vpop.xlane.xlu0 %1159
    %v1161 = vmul.f32 %v1157, %v155
    %v1162 = vmul.f32 %v1160, %v155
    %v1163 = vsub.f32 %v1149, %v1161
    %v1164 = vsub.f32 %v1150, %v1162
    %v1165 = vmul.f32 %v1163, %v1163
    %v1166 = vmul.f32 %v1164, %v1164
    %v1167 = vsel %vm142, %v1165, 0.0
    %1168 = vadd.xlane.f32.xlu0 %v1167
    %v1169 = vpop.xlane.xlu0 %1168
    %v1170 = vsel %vm142, %v1166, 0.0
    %1171 = vadd.xlane.f32.xlu0 %v1170
    %v1172 = vpop.xlane.xlu0 %1171
    %v1173 = vmul.f32 %v1169, %v174
    %v1174 = vmul.f32 %v1172, %v174
    %v1176 = vperm.slane %v1152, 0
    %v1178 = vmul.f32 %v1176, %v1163
    %v1179 = vmul.f32 %v1176, %v1164
    %v1180 = vrsqrt.pop %v1173
    %v1181 = vmul.f32 %v1180, %v1173
    %v1182 = vmul.f32 %v1181, %v1180
    %v1183 = vmul.f32 0.5, %v1182
    %v1184 = vsub.f32 1.5, %v1183
    %v1185 = vmul.f32 %v1180, %v1184
    %v1186 = vmul.f32 %v1173, %v1185
    %vm1187 = vcmp.eq.f32.partialorder %v1173, inf
    %v1188 = vsel %vm1187, %v1173, %v1186
    %vm1189 = vcmp.eq.f32.partialorder %v1173, 0.0
    %v1190 = vand.u32 %v1173, 2147483648
    %v1191 = vsel %vm1189, %v1190, %v1188
    %v1192 = vrsqrt.pop %v1174
    %v1193 = vmul.f32 %v1192, %v1174
    %v1194 = vmul.f32 %v1193, %v1192
    %v1195 = vmul.f32 0.5, %v1194
    %v1196 = vsub.f32 1.5, %v1195
    %v1197 = vmul.f32 %v1192, %v1196
    %v1198 = vmul.f32 %v1174, %v1197
    %vm1199 = vcmp.eq.f32.partialorder %v1174, inf
    %v1200 = vsel %vm1199, %v1174, %v1198
    %vm1201 = vcmp.eq.f32.partialorder %v1174, 0.0
    %v1202 = vand.u32 %v1174, 2147483648
    %v1203 = vsel %vm1201, %v1202, %v1200
    %v1204 = vadd.f32 %v1191, 1e-06
    %v1205 = vadd.f32 %v1203, 1e-06
    %v1206 = vrcp.pop %v1204
    %v1207 = vmul.f32 %v1204, %v1206
    %v1208 = vsub.f32 1.0, %v1207
    %v1209 = vmul.f32 %v1206, %v1208
    %v1210 = vadd.f32 %v1206, %v1209
    %vm1211 = vweird.f32 %v1204
    %vm1212 = vweird.f32 %v1206
    %vm1213 = vmor %vm1211, %vm1212
    %v1214 = vsel %vm1213, %v1206, %v1210
    %v1215 = vand.u32 2147483647, %v1204
    %vm1216 = vcmp.eq.f32.partialorder %v1215, 8.507059e+37
    %v1217 = vand.u32 %v1204, 2147483648
    %v1218 = vor.u32 1.1754944e-38, %v1217
    %v1219 = vsel %vm1216, %v1218, %v1214
    %v1220 = vmul.f32 %v1178, %v1219
    %v1221 = vrcp.pop %v1205
    %v1222 = vmul.f32 %v1205, %v1221
    %v1223 = vsub.f32 1.0, %v1222
    %v1224 = vmul.f32 %v1221, %v1223
    %v1225 = vadd.f32 %v1221, %v1224
    %vm1226 = vweird.f32 %v1205
    %vm1227 = vweird.f32 %v1221
    %vm1228 = vmor %vm1226, %vm1227
    %v1229 = vsel %vm1228, %v1221, %v1225
    %v1230 = vand.u32 2147483647, %v1205
    %vm1231 = vcmp.eq.f32.partialorder %v1230, 8.507059e+37
    %v1232 = vand.u32 %v1205, 2147483648
    %v1233 = vor.u32 1.1754944e-38, %v1232
    %v1234 = vsel %vm1231, %v1233, %v1229
    %v1235 = vmul.f32 %v1179, %v1234
    %v1237 = vperm.slane %v1154, 0
    %v1239 = vadd.f32 %v1220, %v1237
    %v1240 = vadd.f32 %v1235, %v1237
    %s1241 = scalar_lea.vmem %s4, 32
    %v1242 = vld [vmem:[%s1241] sm:$0xff]
    %v1243 = vld [vmem:[%s1241 + $0x8] sm:$0xff]
    %v1244 = vld [vmem:[%s1241 + $0x10] sm:$0xff]
    %v1245 = vld [vmem:[%s1241 + $0x18] sm:$0xff]
    %s1246 = scalar_lea.vmem [#allocation8], 1
    %v1247 = vld [vmem:[%s1246] sm:$0x1]
    %v1249 = vperm.slane %v1247, 0
    %v1252 = vsel %vm142, %v1239, 0
    %v1255 = vsel %vm142, %v1240, 0
    %1257 = vmatpush.msra.mxu0 0.0
    %1258 = vmatpush.msra.mxu0 0.0
    %1259 = vmatpush.msra.mxu0 0.0
    %1260 = vmatpush.msra.mxu0 0.0
    %1261 = vmatpush.msra.mxu0 0.0
    %1262 = vmatpush.msra.mxu0 0.0
    %1263 = vmatpush.msra.mxu0 0.0
    %1264 = vmatpush.msra.mxu0 0.0
    %1265 = vmatpush.msra.mxu0 0.0
    %1266 = vmatpush.msra.mxu0 0.0
    %1267 = vmatpush.msra.mxu0 0.0
    %1268 = vmatpush.msra.mxu0 0.0
    %1269 = vmatpush.msra.mxu0 %v1245
    %1270 = vmatpush.msra.mxu0 %v1244
    %1271 = vmatpush.msra.mxu0 %v1243
    %1272 = vmatpush.msra.mxu0 %v1242
    %1273 = vmatmul.f32.gmra.mxu0 %v1252
    %v1274 = vpop.f32.mrf.mxu0
    %v1275 = vadd.f32 %v1249, %v1274
    %1276 = vmatmul.f32.gmra.mxu0 %v1255
    %v1277 = vpop.f32.mrf.mxu0
    %v1278 = vadd.f32 %v1249, %v1277
    %1279 = vdwg.mxu0
    %1281 = vrot.lane.b32.xlu0 %v1275, 96
    %v1282 = vpop.permute.xlu0 %1281
    %v1283 = vsel %vm289, %v1275, 0
    %v1285 = vsel %vm289, %v1282, 0
    %1287 = vmatpush.xpose.msra.mxu0 0.0
    %1288 = vmatpush.xpose.msra.mxu0 0.0
    %1289 = vmatpush.xpose.msra.mxu0 0.0
    %1290 = vmatpush.xpose.msra.mxu0 0.0
    %1291 = vmatpush.xpose.msra.mxu0 0.0
    %1292 = vmatpush.xpose.msra.mxu0 0.0
    %1293 = vmatpush.xpose.msra.mxu0 0.0
    %1294 = vmatpush.xpose.msra.mxu0 0.0
    %1295 = vmatpush.xpose.msra.mxu0 0.0
    %1296 = vmatpush.xpose.msra.mxu0 0.0
    %1297 = vmatpush.xpose.msra.mxu0 0.0
    %1298 = vmatpush.xpose.msra.mxu0 0.0
    %1299 = vmatpush.xpose.msra.mxu0 0.0
    %1300 = vmatpush.xpose.msra.mxu0 0.0
    %1301 = vmatpush.xpose.msra.mxu0 0.0
    %1302 = vmatpush.xpose.msra.mxu0 %v1285
    %1303 = vmatmul.f32.gmra.mxu0 %v1283
    %v1304 = vpop.f32.mrf.mxu0
    %v1305 = vadd.f32 %v282, %v1304
    %1306 = vdwg.mxu0
    %1308 = vrot.lane.b32.xlu0 %v1278, 96
    %v1309 = vpop.permute.xlu0 %1308
    %v1310 = vsel %vm289, %v1278, 0
    %v1312 = vsel %vm289, %v1309, 0
    %1314 = vmatpush.xpose.msra.mxu0 0.0
    %1315 = vmatpush.xpose.msra.mxu0 0.0
    %1316 = vmatpush.xpose.msra.mxu0 0.0
    %1317 = vmatpush.xpose.msra.mxu0 0.0
    %1318 = vmatpush.xpose.msra.mxu0 0.0
    %1319 = vmatpush.xpose.msra.mxu0 0.0
    %1320 = vmatpush.xpose.msra.mxu0 0.0
    %1321 = vmatpush.xpose.msra.mxu0 0.0
    %1322 = vmatpush.xpose.msra.mxu0 0.0
    %1323 = vmatpush.xpose.msra.mxu0 0.0
    %1324 = vmatpush.xpose.msra.mxu0 0.0
    %1325 = vmatpush.xpose.msra.mxu0 0.0
    %1326 = vmatpush.xpose.msra.mxu0 0.0
    %1327 = vmatpush.xpose.msra.mxu0 0.0
    %1328 = vmatpush.xpose.msra.mxu0 0.0
    %1329 = vmatpush.xpose.msra.mxu0 %v1312
    %1330 = vmatmul.f32.gmra.mxu0 %v1310
    %v1331 = vpop.f32.mrf.mxu0
    %v1332 = vadd.f32 %v283, %v1331
    %1333 = vdwg.mxu0
    %v1334 = vsel %vm289, %v1305, -inf
    %1335 = vmax.xlane.f32.xlu0 %v1334
    %v1336 = vpop.xlane.xlu0 %1335
    %v1337 = vsel %vm289, %v1332, -inf
    %1338 = vmax.xlane.f32.xlu0 %v1337
    %v1339 = vpop.xlane.xlu0 %1338
    %v1340 = vsub.f32 %v1305, %v1336
    %v1341 = vsub.f32 %v1332, %v1339
    %v1342 = vmul.f32 %v1340, 1.442695
    %v1343 = vpow.pop %v1342
    %v1344 = vmul.f32 %v1341, 1.442695
    %v1345 = vpow.pop %v1344
    %v1346 = vsel %vm289, %v1343, 0.0
    %1347 = vadd.xlane.f32.xlu0 %v1346
    %v1348 = vpop.xlane.xlu0 %1347
    %v1349 = vsel %vm289, %v1345, 0.0
    %1350 = vadd.xlane.f32.xlu0 %v1349
    %v1351 = vpop.xlane.xlu0 %1350
    %v1352 = vrcp.pop %v1348
    %v1353 = vmul.f32 %v1348, %v1352
    %v1354 = vsub.f32 1.0, %v1353
    %v1355 = vmul.f32 %v1352, %v1354
    %v1356 = vadd.f32 %v1352, %v1355
    %vm1357 = vweird.f32 %v1348
    %vm1358 = vweird.f32 %v1352
    %vm1359 = vmor %vm1357, %vm1358
    %v1360 = vsel %vm1359, %v1352, %v1356
    %v1361 = vand.u32 2147483647, %v1348
    %vm1362 = vcmp.eq.f32.partialorder %v1361, 8.507059e+37
    %v1363 = vand.u32 %v1348, 2147483648
    %v1364 = vor.u32 1.1754944e-38, %v1363
    %v1365 = vsel %vm1362, %v1364, %v1360
    %v1366 = vmul.f32 %v1343, %v1365
    %v1367 = vrcp.pop %v1351
    %v1368 = vmul.f32 %v1351, %v1367
    %v1369 = vsub.f32 1.0, %v1368
    %v1370 = vmul.f32 %v1367, %v1369
    %v1371 = vadd.f32 %v1367, %v1370
    %vm1372 = vweird.f32 %v1351
    %vm1373 = vweird.f32 %v1367
    %vm1374 = vmor %vm1372, %vm1373
    %v1375 = vsel %vm1374, %v1367, %v1371
    %v1376 = vand.u32 2147483647, %v1351
    %vm1377 = vcmp.eq.f32.partialorder %v1376, 8.507059e+37
    %v1378 = vand.u32 %v1351, 2147483648
    %v1379 = vor.u32 1.1754944e-38, %v1378
    %v1380 = vsel %vm1377, %v1379, %v1375
    %v1381 = vmul.f32 %v1345, %v1380
    %1382 = vrot.lane.b32.xlu0 %v1275, 64
    %v1383 = vpop.permute.xlu0 %1382
    %v1386 = vsel %vm289, %v1366, 0
    %1388 = vmatpush.msra.mxu0 0.0
    %1389 = vmatpush.msra.mxu0 0.0
    %1390 = vmatpush.msra.mxu0 0.0
    %1391 = vmatpush.msra.mxu0 0.0
    %1392 = vmatpush.msra.mxu0 0.0
    %1393 = vmatpush.msra.mxu0 0.0
    %1394 = vmatpush.msra.mxu0 0.0
    %1395 = vmatpush.msra.mxu0 0.0
    %1396 = vmatpush.msra.mxu0 0.0
    %1397 = vmatpush.msra.mxu0 0.0
    %1398 = vmatpush.msra.mxu0 0.0
    %1399 = vmatpush.msra.mxu0 0.0
    %1400 = vmatpush.msra.mxu0 0.0
    %1401 = vmatpush.msra.mxu0 0.0
    %1402 = vmatpush.msra.mxu0 0.0
    %1403 = vmatpush.msra.mxu0 %v1383
    %1404 = vmatmul.f32.gmra.mxu0 %v1386
    %v1405 = vpop.f32.mrf.mxu0
    %v1406 = vadd.f32 0.0, %v1405
    %1407 = vdwg.mxu0
    %1408 = vrot.lane.b32.xlu0 %v1278, 64
    %v1409 = vpop.permute.xlu0 %1408
    %v1412 = vsel %vm289, %v1381, 0
    %1414 = vmatpush.msra.mxu0 0.0
    %1415 = vmatpush.msra.mxu0 0.0
    %1416 = vmatpush.msra.mxu0 0.0
    %1417 = vmatpush.msra.mxu0 0.0
    %1418 = vmatpush.msra.mxu0 0.0
    %1419 = vmatpush.msra.mxu0 0.0
    %1420 = vmatpush.msra.mxu0 0.0
    %1421 = vmatpush.msra.mxu0 0.0
    %1422 = vmatpush.msra.mxu0 0.0
    %1423 = vmatpush.msra.mxu0 0.0
    %1424 = vmatpush.msra.mxu0 0.0
    %1425 = vmatpush.msra.mxu0 0.0
    %1426 = vmatpush.msra.mxu0 0.0
    %1427 = vmatpush.msra.mxu0 0.0
    %1428 = vmatpush.msra.mxu0 0.0
    %1429 = vmatpush.msra.mxu0 %v1409
    %1430 = vmatmul.f32.gmra.mxu0 %v1412
    %v1431 = vpop.f32.mrf.mxu0
    %v1432 = vadd.f32 0.0, %v1431
    %1433 = vdwg.mxu0
    %1434 = vrot.lane.b32.xlu0 %v1275, 120
    %v1435 = vpop.permute.xlu0 %1434
    %1436 = vrot.lane.b32.xlu0 %v1275, 88
    %v1437 = vpop.permute.xlu0 %1436
    %v1438 = vsel %vm289, %v1435, 0
    %v1440 = vsel %vm289, %v1437, 0
    %1442 = vmatpush.xpose.msra.mxu0 0.0
    %1443 = vmatpush.xpose.msra.mxu0 0.0
    %1444 = vmatpush.xpose.msra.mxu0 0.0
    %1445 = vmatpush.xpose.msra.mxu0 0.0
    %1446 = vmatpush.xpose.msra.mxu0 0.0
    %1447 = vmatpush.xpose.msra.mxu0 0.0
    %1448 = vmatpush.xpose.msra.mxu0 0.0
    %1449 = vmatpush.xpose.msra.mxu0 0.0
    %1450 = vmatpush.xpose.msra.mxu0 0.0
    %1451 = vmatpush.xpose.msra.mxu0 0.0
    %1452 = vmatpush.xpose.msra.mxu0 0.0
    %1453 = vmatpush.xpose.msra.mxu0 0.0
    %1454 = vmatpush.xpose.msra.mxu0 0.0
    %1455 = vmatpush.xpose.msra.mxu0 0.0
    %1456 = vmatpush.xpose.msra.mxu0 0.0
    %1457 = vmatpush.xpose.msra.mxu0 %v1440
    %1458 = vmatmul.f32.gmra.mxu0 %v1438
    %v1459 = vpop.f32.mrf.mxu0
    %v1460 = vadd.f32 %v282, %v1459
    %1461 = vdwg.mxu0
    %1462 = vrot.lane.b32.xlu0 %v1278, 120
    %v1463 = vpop.permute.xlu0 %1462
    %1464 = vrot.lane.b32.xlu0 %v1278, 88
    %v1465 = vpop.permute.xlu0 %1464
    %v1466 = vsel %vm289, %v1463, 0
    %v1468 = vsel %vm289, %v1465, 0
    %1470 = vmatpush.xpose.msra.mxu0 0.0
    %1471 = vmatpush.xpose.msra.mxu0 0.0
    %1472 = vmatpush.xpose.msra.mxu0 0.0
    %1473 = vmatpush.xpose.msra.mxu0 0.0
    %1474 = vmatpush.xpose.msra.mxu0 0.0
    %1475 = vmatpush.xpose.msra.mxu0 0.0
    %1476 = vmatpush.xpose.msra.mxu0 0.0
    %1477 = vmatpush.xpose.msra.mxu0 0.0
    %1478 = vmatpush.xpose.msra.mxu0 0.0
    %1479 = vmatpush.xpose.msra.mxu0 0.0
    %1480 = vmatpush.xpose.msra.mxu0 0.0
    %1481 = vmatpush.xpose.msra.mxu0 0.0
    %1482 = vmatpush.xpose.msra.mxu0 0.0
    %1483 = vmatpush.xpose.msra.mxu0 0.0
    %1484 = vmatpush.xpose.msra.mxu0 0.0
    %1485 = vmatpush.xpose.msra.mxu0 %v1468
    %1486 = vmatmul.f32.gmra.mxu0 %v1466
    %v1487 = vpop.f32.mrf.mxu0
    %v1488 = vadd.f32 %v283, %v1487
    %1489 = vdwg.mxu0
    %v1490 = vsel %vm289, %v1460, -inf
    %1491 = vmax.xlane.f32.xlu0 %v1490
    %v1492 = vpop.xlane.xlu0 %1491
    %v1493 = vsel %vm289, %v1488, -inf
    %1494 = vmax.xlane.f32.xlu0 %v1493
    %v1495 = vpop.xlane.xlu0 %1494
    %v1496 = vsub.f32 %v1460, %v1492
    %v1497 = vsub.f32 %v1488, %v1495
    %v1498 = vmul.f32 %v1496, 1.442695
    %v1499 = vpow.pop %v1498
    %v1500 = vmul.f32 %v1497, 1.442695
    %v1501 = vpow.pop %v1500
    %v1502 = vsel %vm289, %v1499, 0.0
    %1503 = vadd.xlane.f32.xlu0 %v1502
    %v1504 = vpop.xlane.xlu0 %1503
    %v1505 = vsel %vm289, %v1501, 0.0
    %1506 = vadd.xlane.f32.xlu0 %v1505
    %v1507 = vpop.xlane.xlu0 %1506
    %v1508 = vrcp.pop %v1504
    %v1509 = vmul.f32 %v1504, %v1508
    %v1510 = vsub.f32 1.0, %v1509
    %v1511 = vmul.f32 %v1508, %v1510
    %v1512 = vadd.f32 %v1508, %v1511
    %vm1513 = vweird.f32 %v1504
    %vm1514 = vweird.f32 %v1508
    %vm1515 = vmor %vm1513, %vm1514
    %v1516 = vsel %vm1515, %v1508, %v1512
    %v1517 = vand.u32 2147483647, %v1504
    %vm1518 = vcmp.eq.f32.partialorder %v1517, 8.507059e+37
    %v1519 = vand.u32 %v1504, 2147483648
    %v1520 = vor.u32 1.1754944e-38, %v1519
    %v1521 = vsel %vm1518, %v1520, %v1516
    %v1522 = vmul.f32 %v1499, %v1521
    %v1523 = vrcp.pop %v1507
    %v1524 = vmul.f32 %v1507, %v1523
    %v1525 = vsub.f32 1.0, %v1524
    %v1526 = vmul.f32 %v1523, %v1525
    %v1527 = vadd.f32 %v1523, %v1526
    %vm1528 = vweird.f32 %v1507
    %vm1529 = vweird.f32 %v1523
    %vm1530 = vmor %vm1528, %vm1529
    %v1531 = vsel %vm1530, %v1523, %v1527
    %v1532 = vand.u32 2147483647, %v1507
    %vm1533 = vcmp.eq.f32.partialorder %v1532, 8.507059e+37
    %v1534 = vand.u32 %v1507, 2147483648
    %v1535 = vor.u32 1.1754944e-38, %v1534
    %v1536 = vsel %vm1533, %v1535, %v1531
    %v1537 = vmul.f32 %v1501, %v1536
    %1538 = vrot.lane.b32.xlu0 %v1275, 56
    %v1539 = vpop.permute.xlu0 %1538
    %v1542 = vsel %vm289, %v1522, 0
    %1544 = vmatpush.msra.mxu0 0.0
    %1545 = vmatpush.msra.mxu0 0.0
    %1546 = vmatpush.msra.mxu0 0.0
    %1547 = vmatpush.msra.mxu0 0.0
    %1548 = vmatpush.msra.mxu0 0.0
    %1549 = vmatpush.msra.mxu0 0.0
    %1550 = vmatpush.msra.mxu0 0.0
    %1551 = vmatpush.msra.mxu0 0.0
    %1552 = vmatpush.msra.mxu0 0.0
    %1553 = vmatpush.msra.mxu0 0.0
    %1554 = vmatpush.msra.mxu0 0.0
    %1555 = vmatpush.msra.mxu0 0.0
    %1556 = vmatpush.msra.mxu0 0.0
    %1557 = vmatpush.msra.mxu0 0.0
    %1558 = vmatpush.msra.mxu0 0.0
    %1559 = vmatpush.msra.mxu0 %v1539
    %1560 = vmatmul.f32.gmra.mxu0 %v1542
    %v1561 = vpop.f32.mrf.mxu0
    %v1562 = vadd.f32 0.0, %v1561
    %1563 = vdwg.mxu0
    %1564 = vrot.lane.b32.xlu0 %v1278, 56
    %v1565 = vpop.permute.xlu0 %1564
    %v1568 = vsel %vm289, %v1537, 0
    %1570 = vmatpush.msra.mxu0 0.0
    %1571 = vmatpush.msra.mxu0 0.0
    %1572 = vmatpush.msra.mxu0 0.0
    %1573 = vmatpush.msra.mxu0 0.0
    %1574 = vmatpush.msra.mxu0 0.0
    %1575 = vmatpush.msra.mxu0 0.0
    %1576 = vmatpush.msra.mxu0 0.0
    %1577 = vmatpush.msra.mxu0 0.0
    %1578 = vmatpush.msra.mxu0 0.0
    %1579 = vmatpush.msra.mxu0 0.0
    %1580 = vmatpush.msra.mxu0 0.0
    %1581 = vmatpush.msra.mxu0 0.0
    %1582 = vmatpush.msra.mxu0 0.0
    %1583 = vmatpush.msra.mxu0 0.0
    %1584 = vmatpush.msra.mxu0 0.0
    %1585 = vmatpush.msra.mxu0 %v1565
    %1586 = vmatmul.f32.gmra.mxu0 %v1568
    %v1587 = vpop.f32.mrf.mxu0
    %v1588 = vadd.f32 0.0, %v1587
    %1589 = vdwg.mxu0
    %1590 = vrot.lane.b32.xlu0 %v1275, 112
    %v1591 = vpop.permute.xlu0 %1590
    %1592 = vrot.lane.b32.xlu0 %v1275, 80
    %v1593 = vpop.permute.xlu0 %1592
    %v1594 = vsel %vm289, %v1591, 0
    %v1596 = vsel %vm289, %v1593, 0
    %1598 = vmatpush.xpose.msra.mxu0 0.0
    %1599 = vmatpush.xpose.msra.mxu0 0.0
    %1600 = vmatpush.xpose.msra.mxu0 0.0
    %1601 = vmatpush.xpose.msra.mxu0 0.0
    %1602 = vmatpush.xpose.msra.mxu0 0.0
    %1603 = vmatpush.xpose.msra.mxu0 0.0
    %1604 = vmatpush.xpose.msra.mxu0 0.0
    %1605 = vmatpush.xpose.msra.mxu0 0.0
    %1606 = vmatpush.xpose.msra.mxu0 0.0
    %1607 = vmatpush.xpose.msra.mxu0 0.0
    %1608 = vmatpush.xpose.msra.mxu0 0.0
    %1609 = vmatpush.xpose.msra.mxu0 0.0
    %1610 = vmatpush.xpose.msra.mxu0 0.0
    %1611 = vmatpush.xpose.msra.mxu0 0.0
    %1612 = vmatpush.xpose.msra.mxu0 0.0
    %1613 = vmatpush.xpose.msra.mxu0 %v1596
    %1614 = vmatmul.f32.gmra.mxu0 %v1594
    %v1615 = vpop.f32.mrf.mxu0
    %v1616 = vadd.f32 %v282, %v1615
    %1617 = vdwg.mxu0
    %1618 = vrot.lane.b32.xlu0 %v1278, 112
    %v1619 = vpop.permute.xlu0 %1618
    %1620 = vrot.lane.b32.xlu0 %v1278, 80
    %v1621 = vpop.permute.xlu0 %1620
    %v1622 = vsel %vm289, %v1619, 0
    %v1624 = vsel %vm289, %v1621, 0
    %1626 = vmatpush.xpose.msra.mxu0 0.0
    %1627 = vmatpush.xpose.msra.mxu0 0.0
    %1628 = vmatpush.xpose.msra.mxu0 0.0
    %1629 = vmatpush.xpose.msra.mxu0 0.0
    %1630 = vmatpush.xpose.msra.mxu0 0.0
    %1631 = vmatpush.xpose.msra.mxu0 0.0
    %1632 = vmatpush.xpose.msra.mxu0 0.0
    %1633 = vmatpush.xpose.msra.mxu0 0.0
    %1634 = vmatpush.xpose.msra.mxu0 0.0
    %1635 = vmatpush.xpose.msra.mxu0 0.0
    %1636 = vmatpush.xpose.msra.mxu0 0.0
    %1637 = vmatpush.xpose.msra.mxu0 0.0
    %1638 = vmatpush.xpose.msra.mxu0 0.0
    %1639 = vmatpush.xpose.msra.mxu0 0.0
    %1640 = vmatpush.xpose.msra.mxu0 0.0
    %1641 = vmatpush.xpose.msra.mxu0 %v1624
    %1642 = vmatmul.f32.gmra.mxu0 %v1622
    %v1643 = vpop.f32.mrf.mxu0
    %v1644 = vadd.f32 %v283, %v1643
    %1645 = vdwg.mxu0
    %v1646 = vsel %vm289, %v1616, -inf
    %1647 = vmax.xlane.f32.xlu0 %v1646
    %v1648 = vpop.xlane.xlu0 %1647
    %v1649 = vsel %vm289, %v1644, -inf
    %1650 = vmax.xlane.f32.xlu0 %v1649
    %v1651 = vpop.xlane.xlu0 %1650
    %v1652 = vsub.f32 %v1616, %v1648
    %v1653 = vsub.f32 %v1644, %v1651
    %v1654 = vmul.f32 %v1652, 1.442695
    %v1655 = vpow.pop %v1654
    %v1656 = vmul.f32 %v1653, 1.442695
    %v1657 = vpow.pop %v1656
    %v1658 = vsel %vm289, %v1655, 0.0
    %1659 = vadd.xlane.f32.xlu0 %v1658
    %v1660 = vpop.xlane.xlu0 %1659
    %v1661 = vsel %vm289, %v1657, 0.0
    %1662 = vadd.xlane.f32.xlu0 %v1661
    %v1663 = vpop.xlane.xlu0 %1662
    %v1664 = vrcp.pop %v1660
    %v1665 = vmul.f32 %v1660, %v1664
    %v1666 = vsub.f32 1.0, %v1665
    %v1667 = vmul.f32 %v1664, %v1666
    %v1668 = vadd.f32 %v1664, %v1667
    %vm1669 = vweird.f32 %v1660
    %vm1670 = vweird.f32 %v1664
    %vm1671 = vmor %vm1669, %vm1670
    %v1672 = vsel %vm1671, %v1664, %v1668
    %v1673 = vand.u32 2147483647, %v1660
    %vm1674 = vcmp.eq.f32.partialorder %v1673, 8.507059e+37
    %v1675 = vand.u32 %v1660, 2147483648
    %v1676 = vor.u32 1.1754944e-38, %v1675
    %v1677 = vsel %vm1674, %v1676, %v1672
    %v1678 = vmul.f32 %v1655, %v1677
    %v1679 = vrcp.pop %v1663
    %v1680 = vmul.f32 %v1663, %v1679
    %v1681 = vsub.f32 1.0, %v1680
    %v1682 = vmul.f32 %v1679, %v1681
    %v1683 = vadd.f32 %v1679, %v1682
    %vm1684 = vweird.f32 %v1663
    %vm1685 = vweird.f32 %v1679
    %vm1686 = vmor %vm1684, %vm1685
    %v1687 = vsel %vm1686, %v1679, %v1683
    %v1688 = vand.u32 2147483647, %v1663
    %vm1689 = vcmp.eq.f32.partialorder %v1688, 8.507059e+37
    %v1690 = vand.u32 %v1663, 2147483648
    %v1691 = vor.u32 1.1754944e-38, %v1690
    %v1692 = vsel %vm1689, %v1691, %v1687
    %v1693 = vmul.f32 %v1657, %v1692
    %1694 = vrot.lane.b32.xlu0 %v1275, 48
    %v1695 = vpop.permute.xlu0 %1694
    %v1698 = vsel %vm289, %v1678, 0
    %1700 = vmatpush.msra.mxu0 0.0
    %1701 = vmatpush.msra.mxu0 0.0
    %1702 = vmatpush.msra.mxu0 0.0
    %1703 = vmatpush.msra.mxu0 0.0
    %1704 = vmatpush.msra.mxu0 0.0
    %1705 = vmatpush.msra.mxu0 0.0
    %1706 = vmatpush.msra.mxu0 0.0
    %1707 = vmatpush.msra.mxu0 0.0
    %1708 = vmatpush.msra.mxu0 0.0
    %1709 = vmatpush.msra.mxu0 0.0
    %1710 = vmatpush.msra.mxu0 0.0
    %1711 = vmatpush.msra.mxu0 0.0
    %1712 = vmatpush.msra.mxu0 0.0
    %1713 = vmatpush.msra.mxu0 0.0
    %1714 = vmatpush.msra.mxu0 0.0
    %1715 = vmatpush.msra.mxu0 %v1695
    %1716 = vmatmul.f32.gmra.mxu0 %v1698
    %v1717 = vpop.f32.mrf.mxu0
    %v1718 = vadd.f32 0.0, %v1717
    %1719 = vdwg.mxu0
    %1720 = vrot.lane.b32.xlu0 %v1278, 48
    %v1721 = vpop.permute.xlu0 %1720
    %v1724 = vsel %vm289, %v1693, 0
    %1726 = vmatpush.msra.mxu0 0.0
    %1727 = vmatpush.msra.mxu0 0.0
    %1728 = vmatpush.msra.mxu0 0.0
    %1729 = vmatpush.msra.mxu0 0.0
    %1730 = vmatpush.msra.mxu0 0.0
    %1731 = vmatpush.msra.mxu0 0.0
    %1732 = vmatpush.msra.mxu0 0.0
    %1733 = vmatpush.msra.mxu0 0.0
    %1734 = vmatpush.msra.mxu0 0.0
    %1735 = vmatpush.msra.mxu0 0.0
    %1736 = vmatpush.msra.mxu0 0.0
    %1737 = vmatpush.msra.mxu0 0.0
    %1738 = vmatpush.msra.mxu0 0.0
    %1739 = vmatpush.msra.mxu0 0.0
    %1740 = vmatpush.msra.mxu0 0.0
    %1741 = vmatpush.msra.mxu0 %v1721
    %1742 = vmatmul.f32.gmra.mxu0 %v1724
    %v1743 = vpop.f32.mrf.mxu0
    %v1744 = vadd.f32 0.0, %v1743
    %1745 = vdwg.mxu0
    %1746 = vrot.lane.b32.xlu0 %v1275, 104
    %v1747 = vpop.permute.xlu0 %1746
    %1748 = vrot.lane.b32.xlu0 %v1275, 72
    %v1749 = vpop.permute.xlu0 %1748
    %v1750 = vsel %vm289, %v1747, 0
    %v1752 = vsel %vm289, %v1749, 0
    %1754 = vmatpush.xpose.msra.mxu0 0.0
    %1755 = vmatpush.xpose.msra.mxu0 0.0
    %1756 = vmatpush.xpose.msra.mxu0 0.0
    %1757 = vmatpush.xpose.msra.mxu0 0.0
    %1758 = vmatpush.xpose.msra.mxu0 0.0
    %1759 = vmatpush.xpose.msra.mxu0 0.0
    %1760 = vmatpush.xpose.msra.mxu0 0.0
    %1761 = vmatpush.xpose.msra.mxu0 0.0
    %1762 = vmatpush.xpose.msra.mxu0 0.0
    %1763 = vmatpush.xpose.msra.mxu0 0.0
    %1764 = vmatpush.xpose.msra.mxu0 0.0
    %1765 = vmatpush.xpose.msra.mxu0 0.0
    %1766 = vmatpush.xpose.msra.mxu0 0.0
    %1767 = vmatpush.xpose.msra.mxu0 0.0
    %1768 = vmatpush.xpose.msra.mxu0 0.0
    %1769 = vmatpush.xpose.msra.mxu0 %v1752
    %1770 = vmatmul.f32.gmra.mxu0 %v1750
    %v1771 = vpop.f32.mrf.mxu0
    %v1772 = vadd.f32 %v282, %v1771
    %1773 = vdwg.mxu0
    %1774 = vrot.lane.b32.xlu0 %v1278, 104
    %v1775 = vpop.permute.xlu0 %1774
    %1776 = vrot.lane.b32.xlu0 %v1278, 72
    %v1777 = vpop.permute.xlu0 %1776
    %v1778 = vsel %vm289, %v1775, 0
    %v1780 = vsel %vm289, %v1777, 0
    %1782 = vmatpush.xpose.msra.mxu0 0.0
    %1783 = vmatpush.xpose.msra.mxu0 0.0
    %1784 = vmatpush.xpose.msra.mxu0 0.0
    %1785 = vmatpush.xpose.msra.mxu0 0.0
    %1786 = vmatpush.xpose.msra.mxu0 0.0
    %1787 = vmatpush.xpose.msra.mxu0 0.0
    %1788 = vmatpush.xpose.msra.mxu0 0.0
    %1789 = vmatpush.xpose.msra.mxu0 0.0
    %1790 = vmatpush.xpose.msra.mxu0 0.0
    %1791 = vmatpush.xpose.msra.mxu0 0.0
    %1792 = vmatpush.xpose.msra.mxu0 0.0
    %1793 = vmatpush.xpose.msra.mxu0 0.0
    %1794 = vmatpush.xpose.msra.mxu0 0.0
    %1795 = vmatpush.xpose.msra.mxu0 0.0
    %1796 = vmatpush.xpose.msra.mxu0 0.0
    %1797 = vmatpush.xpose.msra.mxu0 %v1780
    %1798 = vmatmul.f32.gmra.mxu0 %v1778
    %v1799 = vpop.f32.mrf.mxu0
    %v1800 = vadd.f32 %v283, %v1799
    %1801 = vdwg.mxu0
    %v1802 = vsel %vm289, %v1772, -inf
    %1803 = vmax.xlane.f32.xlu0 %v1802
    %v1804 = vpop.xlane.xlu0 %1803
    %v1805 = vsel %vm289, %v1800, -inf
    %1806 = vmax.xlane.f32.xlu0 %v1805
    %v1807 = vpop.xlane.xlu0 %1806
    %v1808 = vsub.f32 %v1772, %v1804
    %v1809 = vsub.f32 %v1800, %v1807
    %v1810 = vmul.f32 %v1808, 1.442695
    %v1811 = vpow.pop %v1810
    %v1812 = vmul.f32 %v1809, 1.442695
    %v1813 = vpow.pop %v1812
    %v1814 = vsel %vm289, %v1811, 0.0
    %1815 = vadd.xlane.f32.xlu0 %v1814
    %v1816 = vpop.xlane.xlu0 %1815
    %v1817 = vsel %vm289, %v1813, 0.0
    %1818 = vadd.xlane.f32.xlu0 %v1817
    %v1819 = vpop.xlane.xlu0 %1818
    %v1820 = vrcp.pop %v1816
    %v1821 = vmul.f32 %v1816, %v1820
    %v1822 = vsub.f32 1.0, %v1821
    %v1823 = vmul.f32 %v1820, %v1822
    %v1824 = vadd.f32 %v1820, %v1823
    %vm1825 = vweird.f32 %v1816
    %vm1826 = vweird.f32 %v1820
    %vm1827 = vmor %vm1825, %vm1826
    %v1828 = vsel %vm1827, %v1820, %v1824
    %v1829 = vand.u32 2147483647, %v1816
    %vm1830 = vcmp.eq.f32.partialorder %v1829, 8.507059e+37
    %v1831 = vand.u32 %v1816, 2147483648
    %v1832 = vor.u32 1.1754944e-38, %v1831
    %v1833 = vsel %vm1830, %v1832, %v1828
    %v1834 = vmul.f32 %v1811, %v1833
    %v1835 = vrcp.pop %v1819
    %v1836 = vmul.f32 %v1819, %v1835
    %v1837 = vsub.f32 1.0, %v1836
    %v1838 = vmul.f32 %v1835, %v1837
    %v1839 = vadd.f32 %v1835, %v1838
    %vm1840 = vweird.f32 %v1819
    %vm1841 = vweird.f32 %v1835
    %vm1842 = vmor %vm1840, %vm1841
    %v1843 = vsel %vm1842, %v1835, %v1839
    %v1844 = vand.u32 2147483647, %v1819
    %vm1845 = vcmp.eq.f32.partialorder %v1844, 8.507059e+37
    %v1846 = vand.u32 %v1819, 2147483648
    %v1847 = vor.u32 1.1754944e-38, %v1846
    %v1848 = vsel %vm1845, %v1847, %v1843
    %v1849 = vmul.f32 %v1813, %v1848
    %1850 = vrot.lane.b32.xlu0 %v1275, 40
    %v1851 = vpop.permute.xlu0 %1850
    %v1854 = vsel %vm289, %v1834, 0
    %1856 = vmatpush.msra.mxu0 0.0
    %1857 = vmatpush.msra.mxu0 0.0
    %1858 = vmatpush.msra.mxu0 0.0
    %1859 = vmatpush.msra.mxu0 0.0
    %1860 = vmatpush.msra.mxu0 0.0
    %1861 = vmatpush.msra.mxu0 0.0
    %1862 = vmatpush.msra.mxu0 0.0
    %1863 = vmatpush.msra.mxu0 0.0
    %1864 = vmatpush.msra.mxu0 0.0
    %1865 = vmatpush.msra.mxu0 0.0
    %1866 = vmatpush.msra.mxu0 0.0
    %1867 = vmatpush.msra.mxu0 0.0
    %1868 = vmatpush.msra.mxu0 0.0
    %1869 = vmatpush.msra.mxu0 0.0
    %1870 = vmatpush.msra.mxu0 0.0
    %1871 = vmatpush.msra.mxu0 %v1851
    %1872 = vmatmul.f32.gmra.mxu0 %v1854
    %v1873 = vpop.f32.mrf.mxu0
    %v1874 = vadd.f32 0.0, %v1873
    %1875 = vdwg.mxu0
    %1876 = vrot.lane.b32.xlu0 %v1278, 40
    %v1877 = vpop.permute.xlu0 %1876
    %v1880 = vsel %vm289, %v1849, 0
    %1882 = vmatpush.msra.mxu0 0.0
    %1883 = vmatpush.msra.mxu0 0.0
    %1884 = vmatpush.msra.mxu0 0.0
    %1885 = vmatpush.msra.mxu0 0.0
    %1886 = vmatpush.msra.mxu0 0.0
    %1887 = vmatpush.msra.mxu0 0.0
    %1888 = vmatpush.msra.mxu0 0.0
    %1889 = vmatpush.msra.mxu0 0.0
    %1890 = vmatpush.msra.mxu0 0.0
    %1891 = vmatpush.msra.mxu0 0.0
    %1892 = vmatpush.msra.mxu0 0.0
    %1893 = vmatpush.msra.mxu0 0.0
    %1894 = vmatpush.msra.mxu0 0.0
    %1895 = vmatpush.msra.mxu0 0.0
    %1896 = vmatpush.msra.mxu0 0.0
    %1897 = vmatpush.msra.mxu0 %v1877
    %1898 = vmatmul.f32.gmra.mxu0 %v1880
    %v1899 = vpop.f32.mrf.mxu0
    %v1900 = vadd.f32 0.0, %v1899
    %1901 = vdwg.mxu0
    %1904 = vrot.lane.b32.xlu0 %v1562, 8
    %v1905 = vpop.permute.xlu0 %1904
    %1906 = vrot.lane.b32.xlu0 %v1588, 8
    %v1907 = vpop.permute.xlu0 %1906
    %1912 = vrot.lane.b32.xlu0 %v1718, 16
    %v1913 = vpop.permute.xlu0 %1912
    %1914 = vrot.lane.b32.xlu0 %v1744, 16
    %v1915 = vpop.permute.xlu0 %1914
    %1920 = vrot.lane.b32.xlu0 %v1874, 24
    %v1921 = vpop.permute.xlu0 %1920
    %1922 = vrot.lane.b32.xlu0 %v1900, 24
    %v1923 = vpop.permute.xlu0 %1922
    %v1926 = vsel %vm289, %v1406, %v1905
    %v1927 = vsel %vm289, %v1432, %v1907
    %v1928 = vsel %vm935, %v1926, %v1913
    %v1929 = vsel %vm935, %v1927, %v1915
    %v1930 = vsel %vm938, %v1928, %v1921
    %v1931 = vsel %vm938, %v1929, %v1923
    %s1932 = scalar_lea.vmem %s6, 32
    %v1933 = vld [vmem:[%s1932] sm:$0xff]
    %v1934 = vld [vmem:[%s1932 + $0x8] sm:$0xff]
    %v1935 = vld [vmem:[%s1932 + $0x10] sm:$0xff]
    %v1936 = vld [vmem:[%s1932 + $0x18] sm:$0xff]
    %s1937 = scalar_lea.vmem %s7, 1
    %v1938 = vld [vmem:[%s1937] sm:$0x1]
    %v1940 = vperm.slane %v1938, 0
    %v1943 = vsel %vm142, %v1930, 0
    %v1946 = vsel %vm142, %v1931, 0
    %1948 = vmatpush.msra.mxu0 0.0
    %1949 = vmatpush.msra.mxu0 0.0
    %1950 = vmatpush.msra.mxu0 0.0
    %1951 = vmatpush.msra.mxu0 0.0
    %1952 = vmatpush.msra.mxu0 0.0
    %1953 = vmatpush.msra.mxu0 0.0
    %1954 = vmatpush.msra.mxu0 0.0
    %1955 = vmatpush.msra.mxu0 0.0
    %1956 = vmatpush.msra.mxu0 0.0
    %1957 = vmatpush.msra.mxu0 0.0
    %1958 = vmatpush.msra.mxu0 0.0
    %1959 = vmatpush.msra.mxu0 0.0
    %1960 = vmatpush.msra.mxu0 %v1936
    %1961 = vmatpush.msra.mxu0 %v1935
    %1962 = vmatpush.msra.mxu0 %v1934
    %1963 = vmatpush.msra.mxu0 %v1933
    %1964 = vmatmul.f32.gmra.mxu0 %v1943
    %v1965 = vpop.f32.mrf.mxu0
    %v1966 = vadd.f32 %v1940, %v1965
    %1967 = vmatmul.f32.gmra.mxu0 %v1946
    %v1968 = vpop.f32.mrf.mxu0
    %v1969 = vadd.f32 %v1940, %v1968
    %1970 = vdwg.mxu0
    %v1971 = vadd.f32 %v1149, %v1966
    %v1972 = vadd.f32 %v1150, %v1969
    %s1973 = scalar_lea.vmem [#allocation10], 1
    %v1974 = vld [vmem:[%s1973] sm:$0x1]
    %s1975 = scalar_lea.vmem %s9, 1
    %v1976 = vld [vmem:[%s1975] sm:$0x1]
    %v1977 = vsel %vm142, %v1971, 0.0
    %1978 = vadd.xlane.f32.xlu0 %v1977
    %v1979 = vpop.xlane.xlu0 %1978
    %v1980 = vsel %vm142, %v1972, 0.0
    %1981 = vadd.xlane.f32.xlu0 %v1980
    %v1982 = vpop.xlane.xlu0 %1981
    %v1983 = vmul.f32 %v1979, %v155
    %v1984 = vmul.f32 %v1982, %v155
    %v1985 = vsub.f32 %v1971, %v1983
    %v1986 = vsub.f32 %v1972, %v1984
    %v1987 = vmul.f32 %v1985, %v1985
    %v1988 = vmul.f32 %v1986, %v1986
    %v1989 = vsel %vm142, %v1987, 0.0
    %1990 = vadd.xlane.f32.xlu0 %v1989
    %v1991 = vpop.xlane.xlu0 %1990
    %v1992 = vsel %vm142, %v1988, 0.0
    %1993 = vadd.xlane.f32.xlu0 %v1992
    %v1994 = vpop.xlane.xlu0 %1993
    %v1995 = vmul.f32 %v1991, %v174
    %v1996 = vmul.f32 %v1994, %v174
    %v1998 = vperm.slane %v1974, 0
    %v2000 = vmul.f32 %v1998, %v1985
    %v2001 = vmul.f32 %v1998, %v1986
    %v2002 = vrsqrt.pop %v1995
    %v2003 = vmul.f32 %v2002, %v1995
    %v2004 = vmul.f32 %v2003, %v2002
    %v2005 = vmul.f32 0.5, %v2004
    %v2006 = vsub.f32 1.5, %v2005
    %v2007 = vmul.f32 %v2002, %v2006
    %v2008 = vmul.f32 %v1995, %v2007
    %vm2009 = vcmp.eq.f32.partialorder %v1995, inf
    %v2010 = vsel %vm2009, %v1995, %v2008
    %vm2011 = vcmp.eq.f32.partialorder %v1995, 0.0
    %v2012 = vand.u32 %v1995, 2147483648
    %v2013 = vsel %vm2011, %v2012, %v2010
    %v2014 = vrsqrt.pop %v1996
    %v2015 = vmul.f32 %v2014, %v1996
    %v2016 = vmul.f32 %v2015, %v2014
    %v2017 = vmul.f32 0.5, %v2016
    %v2018 = vsub.f32 1.5, %v2017
    %v2019 = vmul.f32 %v2014, %v2018
    %v2020 = vmul.f32 %v1996, %v2019
    %vm2021 = vcmp.eq.f32.partialorder %v1996, inf
    %v2022 = vsel %vm2021, %v1996, %v2020
    %vm2023 = vcmp.eq.f32.partialorder %v1996, 0.0
    %v2024 = vand.u32 %v1996, 2147483648
    %v2025 = vsel %vm2023, %v2024, %v2022
    %v2026 = vadd.f32 %v2013, 1e-06
    %v2027 = vadd.f32 %v2025, 1e-06
    %v2028 = vrcp.pop %v2026
    %v2029 = vmul.f32 %v2026, %v2028
    %v2030 = vsub.f32 1.0, %v2029
    %v2031 = vmul.f32 %v2028, %v2030
    %v2032 = vadd.f32 %v2028, %v2031
    %vm2033 = vweird.f32 %v2026
    %vm2034 = vweird.f32 %v2028
    %vm2035 = vmor %vm2033, %vm2034
    %v2036 = vsel %vm2035, %v2028, %v2032
    %v2037 = vand.u32 2147483647, %v2026
    %vm2038 = vcmp.eq.f32.partialorder %v2037, 8.507059e+37
    %v2039 = vand.u32 %v2026, 2147483648
    %v2040 = vor.u32 1.1754944e-38, %v2039
    %v2041 = vsel %vm2038, %v2040, %v2036
    %v2042 = vmul.f32 %v2000, %v2041
    %v2043 = vrcp.pop %v2027
    %v2044 = vmul.f32 %v2027, %v2043
    %v2045 = vsub.f32 1.0, %v2044
    %v2046 = vmul.f32 %v2043, %v2045
    %v2047 = vadd.f32 %v2043, %v2046
    %vm2048 = vweird.f32 %v2027
    %vm2049 = vweird.f32 %v2043
    %vm2050 = vmor %vm2048, %vm2049
    %v2051 = vsel %vm2050, %v2043, %v2047
    %v2052 = vand.u32 2147483647, %v2027
    %vm2053 = vcmp.eq.f32.partialorder %v2052, 8.507059e+37
    %v2054 = vand.u32 %v2027, 2147483648
    %v2055 = vor.u32 1.1754944e-38, %v2054
    %v2056 = vsel %vm2053, %v2055, %v2051
    %v2057 = vmul.f32 %v2001, %v2056
    %v2059 = vperm.slane %v1976, 0
    %v2061 = vadd.f32 %v2042, %v2059
    %v2062 = vadd.f32 %v2057, %v2059
    %s2063 = scalar_lea.vmem %s10, 32
    %v2064 = vld [vmem:[%s2063] sm:$0xff]
    %v2065 = vld [vmem:[%s2063 + $0x8] sm:$0xff]
    %v2066 = vld [vmem:[%s2063 + $0x10] sm:$0xff]
    %v2067 = vld [vmem:[%s2063 + $0x18] sm:$0xff]
    %s2068 = scalar_lea.vmem %s11, 1
    %v2069 = vld [vmem:[%s2068] sm:$0x1]
    %v2071 = vperm.slane %v2069, 0
    %v2074 = vsel %vm142, %v2061, 0
    %v2077 = vsel %vm142, %v2062, 0
    %2079 = vmatpush.msra.mxu0 0.0
    %2080 = vmatpush.msra.mxu0 0.0
    %2081 = vmatpush.msra.mxu0 0.0
    %2082 = vmatpush.msra.mxu0 0.0
    %2083 = vmatpush.msra.mxu0 0.0
    %2084 = vmatpush.msra.mxu0 0.0
    %2085 = vmatpush.msra.mxu0 0.0
    %2086 = vmatpush.msra.mxu0 0.0
    %2087 = vmatpush.msra.mxu0 0.0
    %2088 = vmatpush.msra.mxu0 0.0
    %2089 = vmatpush.msra.mxu0 0.0
    %2090 = vmatpush.msra.mxu0 0.0
    %2091 = vmatpush.msra.mxu0 %v2067
    %2092 = vmatpush.msra.mxu0 %v2066
    %2093 = vmatpush.msra.mxu0 %v2065
    %2094 = vmatpush.msra.mxu0 %v2064
    %2095 = vmatmul.f32.gmra.mxu0 %v2074
    %v2096 = vpop.f32.mrf.mxu0
    %v2097 = vadd.f32 %v2071, %v2096
    %2098 = vmatmul.f32.gmra.mxu0 %v2077
    %v2099 = vpop.f32.mrf.mxu0
    %v2100 = vadd.f32 %v2071, %v2099
    %2101 = vdwg.mxu0
    %v2102 = vmax.f32 %v2097, 0.0
    %v2103 = vmax.f32 %v2100, 0.0
    %s2104 = scalar_lea.vmem %s12, 64
    %v2105 = vld [vmem:[%s2104] sm:$0xff]
    %v2106 = vld [vmem:[%s2104 + $0x8] sm:$0xff]
    %v2107 = vld [vmem:[%s2104 + $0x10] sm:$0xff]
    %v2108 = vld [vmem:[%s2104 + $0x18] sm:$0xff]
    %v2109 = vld [vmem:[%s2104 + $0x20] sm:$0xff]
    %v2110 = vld [vmem:[%s2104 + $0x28] sm:$0xff]
    %v2111 = vld [vmem:[%s2104 + $0x30] sm:$0xff]
    %v2112 = vld [vmem:[%s2104 + $0x38] sm:$0xff]
    %s2113 = scalar_lea.vmem %s13, 1
    %v2114 = vld [vmem:[%s2113] sm:$0x1]
    %v2116 = vperm.slane %v2114, 0
    %v2119 = vsel %vm1119, %v2102, 0
    %v2122 = vsel %vm1119, %v2103, 0
    %2124 = vmatpush.msra.mxu0 0.0
    %2125 = vmatpush.msra.mxu0 0.0
    %2126 = vmatpush.msra.mxu0 0.0
    %2127 = vmatpush.msra.mxu0 0.0
    %2128 = vmatpush.msra.mxu0 0.0
    %2129 = vmatpush.msra.mxu0 0.0
    %2130 = vmatpush.msra.mxu0 0.0
    %2131 = vmatpush.msra.mxu0 0.0
    %2132 = vmatpush.msra.mxu0 %v2112
    %2133 = vmatpush.msra.mxu0 %v2111
    %2134 = vmatpush.msra.mxu0 %v2110
    %2135 = vmatpush.msra.mxu0 %v2109
    %2136 = vmatpush.msra.mxu0 %v2108
    %2137 = vmatpush.msra.mxu0 %v2107
    %2138 = vmatpush.msra.mxu0 %v2106
    %2139 = vmatpush.msra.mxu0 %v2105
    %2140 = vmatmul.f32.gmra.mxu0 %v2119
    %v2141 = vpop.f32.mrf.mxu0
    %v2142 = vadd.f32 %v2116, %v2141
    %2143 = vmatmul.f32.gmra.mxu0 %v2122
    %v2144 = vpop.f32.mrf.mxu0
    %v2145 = vadd.f32 %v2116, %v2144
    %2146 = vdwg.mxu0
    %v2147 = vadd.f32 %v1971, %v2142
    %v2148 = vadd.f32 %v1972, %v2145
    %v2149 = vld [vmem:[%s14] sm:$0x1]
    %v2150 = vld [vmem:[%s15] sm:$0x1]
    %v2151 = vsel %vm142, %v2147, 0.0
    %2152 = vadd.xlane.f32.xlu0 %v2151
    %v2153 = vpop.xlane.xlu0 %2152
    %v2154 = vsel %vm142, %v2148, 0.0
    %2155 = vadd.xlane.f32.xlu0 %v2154
    %v2156 = vpop.xlane.xlu0 %2155
    %v2157 = vmul.f32 %v2153, %v155
    %v2158 = vmul.f32 %v2156, %v155
    %v2159 = vsub.f32 %v2147, %v2157
    %v2160 = vsub.f32 %v2148, %v2158
    %v2161 = vmul.f32 %v2159, %v2159
    %v2162 = vmul.f32 %v2160, %v2160
    %v2163 = vsel %vm142, %v2161, 0.0
    %2164 = vadd.xlane.f32.xlu0 %v2163
    %v2165 = vpop.xlane.xlu0 %2164
    %v2166 = vsel %vm142, %v2162, 0.0
    %2167 = vadd.xlane.f32.xlu0 %v2166
    %v2168 = vpop.xlane.xlu0 %2167
    %v2169 = vmul.f32 %v2165, %v174
    %v2170 = vmul.f32 %v2168, %v174
    %v2172 = vperm.slane %v2149, 0
    %v2174 = vmul.f32 %v2172, %v2159
    %v2175 = vmul.f32 %v2172, %v2160
    %v2176 = vrsqrt.pop %v2169
    %v2177 = vmul.f32 %v2176, %v2169
    %v2178 = vmul.f32 %v2177, %v2176
    %v2179 = vmul.f32 0.5, %v2178
    %v2180 = vsub.f32 1.5, %v2179
    %v2181 = vmul.f32 %v2176, %v2180
    %v2182 = vmul.f32 %v2169, %v2181
    %vm2183 = vcmp.eq.f32.partialorder %v2169, inf
    %v2184 = vsel %vm2183, %v2169, %v2182
    %vm2185 = vcmp.eq.f32.partialorder %v2169, 0.0
    %v2186 = vand.u32 %v2169, 2147483648
    %v2187 = vsel %vm2185, %v2186, %v2184
    %v2188 = vrsqrt.pop %v2170
    %v2189 = vmul.f32 %v2188, %v2170
    %v2190 = vmul.f32 %v2189, %v2188
    %v2191 = vmul.f32 0.5, %v2190
    %v2192 = vsub.f32 1.5, %v2191
    %v2193 = vmul.f32 %v2188, %v2192
    %v2194 = vmul.f32 %v2170, %v2193
    %vm2195 = vcmp.eq.f32.partialorder %v2170, inf
    %v2196 = vsel %vm2195, %v2170, %v2194
    %vm2197 = vcmp.eq.f32.partialorder %v2170, 0.0
    %v2198 = vand.u32 %v2170, 2147483648
    %v2199 = vsel %vm2197, %v2198, %v2196
    %v2200 = vadd.f32 %v2187, 1e-06
    %v2201 = vadd.f32 %v2199, 1e-06
    %v2202 = vrcp.pop %v2200
    %v2203 = vmul.f32 %v2200, %v2202
    %v2204 = vsub.f32 1.0, %v2203
    %v2205 = vmul.f32 %v2202, %v2204
    %v2206 = vadd.f32 %v2202, %v2205
    %vm2207 = vweird.f32 %v2200
    %vm2208 = vweird.f32 %v2202
    %vm2209 = vmor %vm2207, %vm2208
    %v2210 = vsel %vm2209, %v2202, %v2206
    %v2211 = vand.u32 2147483647, %v2200
    %vm2212 = vcmp.eq.f32.partialorder %v2211, 8.507059e+37
    %v2213 = vand.u32 %v2200, 2147483648
    %v2214 = vor.u32 1.1754944e-38, %v2213
    %v2215 = vsel %vm2212, %v2214, %v2210
    %v2216 = vmul.f32 %v2174, %v2215
    %v2217 = vrcp.pop %v2201
    %v2218 = vmul.f32 %v2201, %v2217
    %v2219 = vsub.f32 1.0, %v2218
    %v2220 = vmul.f32 %v2217, %v2219
    %v2221 = vadd.f32 %v2217, %v2220
    %vm2222 = vweird.f32 %v2201
    %vm2223 = vweird.f32 %v2217
    %vm2224 = vmor %vm2222, %vm2223
    %v2225 = vsel %vm2224, %v2217, %v2221
    %v2226 = vand.u32 2147483647, %v2201
    %vm2227 = vcmp.eq.f32.partialorder %v2226, 8.507059e+37
    %v2228 = vand.u32 %v2201, 2147483648
    %v2229 = vor.u32 1.1754944e-38, %v2228
    %v2230 = vsel %vm2227, %v2229, %v2225
    %v2231 = vmul.f32 %v2175, %v2230
    %v2233 = vperm.slane %v2150, 0
    %v2235 = vadd.f32 %v2216, %v2233
    %v2236 = vadd.f32 %v2231, %v2233
    %2237 = vst.msk [vmem:[#allocation11] sm:$0xff] %vm142, %v2235
    %2238 = vst.msk [vmem:[#allocation11 + $0x8] sm:$0xff] %vm142, %v2236
    // Predicated region
    $region86: #{tpu_custom_call.1} parent=1 // pred_check
      _
    $region87: #{tpu_custom_call.1} parent=1 // pred_check_branch
      %2240 = sbr.rel (0) target = $region89
    $region88: #{tpu_custom_call.1} parent=1 // pred_region
      %2242 = vsyncadd [#allocation4], 0
      %s2243 = sshll.u32 [#allocation11], 4
      %s2244 = int_to_ptr.vmem [resolvable:$true] %s2243
      %s2245 = sshll.u32 %s16, 4
      %s2246 = int_to_ptr.hbm [resolvable:$true] %s2245
      %2251 = dma.vmem_to_hbm [thread:$0]  %s2244, 256, %s2246, [#allocation4], 128, 128, 8
    $region89: #{tpu_custom_call.1} parent=1 // pred_fallthru
      _
    // Predicated region
    $region90: #{tpu_custom_call.1} parent=1 // pred_check
      _
    $region91: #{tpu_custom_call.1} parent=1 // pred_check_branch
      %2253 = sbr.rel (0) target = $region93
    $region92: #{tpu_custom_call.1} parent=1 // pred_region
      %2255 = dma.done [#allocation4], 256
    $region93: #{tpu_custom_call.1} parent=1 // pred_fallthru
      _
    %2256 = vsyncpa [#allocation3], 1
    %2257 = vsyncpa [#allocation6], 1
    %2258 = vsyncpa [#allocation9], 1
    %2259 = vsyncpa [#allocation4], 1

</llo_original>
